<compile_context>
chip_gen: v5e
topology: v5e:2x2
jax: 0.10.0
libtpu: 0.0.40
codegen_flags: <defaults>
</compile_context>

<pallas_src>
from functools import partial

import jax
import jax.numpy as jnp
from jax.experimental import pallas as pl
from jax.experimental.pallas import tpu as pltpu


def toy_model_kernel(w_ref, b_ref, x_ref, o_ref, *, n_instances, n_hidden, n_features):
    # w_ref: SMEM (I*H*F,) f32    b_ref: SMEM (I*F,) f32
    # x_ref: VMEM (I, F, TB)      o_ref: VMEM (I, F, TB)
    I, H, F = n_instances, n_hidden, n_features

    for i in range(I):
        xi = x_ref[i].astype(jnp.float32)                    # (F, TB) lane-dense

        # hidden[h, :] = sum_f W[i, h, f] * x[i, f, :]  (scalar-broadcast FMAs)
        hiddens = []
        for h in range(H):
            acc = w_ref[(i * H + h) * F + 0] * xi[0:1, :]     # (1, TB)
            for f in range(1, F):
                acc = acc + w_ref[(i * H + h) * F + f] * xi[f:f + 1, :]
            hiddens.append(acc)

        # out[f, :] = relu(sum_h W[i, h, f] * hidden[h, :] + b[i, f])
        rows = []
        for f in range(F):
            out = b_ref[i * F + f] + w_ref[(i * H + 0) * F + f] * hiddens[0]
            for h in range(1, H):
                out = out + w_ref[(i * H + h) * F + f] * hiddens[h]
            rows.append(jnp.maximum(out, 0.0))                # (1, TB)

        o_ref[i] = jnp.concatenate(rows, axis=0).astype(o_ref.dtype)   # (F, TB)


def toy_model_forward(features_bif, W, b_final, *, block_b=512):
    """features_bif: [batch, n_instances, n_features] (PyTorch convention).
    W: [n_instances, n_hidden, n_features], b_final: [n_instances, n_features].
    """
    B, I, F = features_bif.shape
    H = W.shape[1]

    # Layout plumbing in the wrapper: batch goes to the lane (last) axis.
    x_ifb = jnp.transpose(features_bif, (1, 2, 0))            # (I, F, B)

    # Pick a lane-dense batch tile (multiple of 128) and pad B up to it.
    TB = min(block_b, max(128, pl.cdiv(B, 128) * 128))
    Bp = pl.cdiv(B, TB) * TB
    if Bp != B:
        x_ifb = jnp.pad(x_ifb, ((0, 0), (0, 0), (0, Bp - B)))

    # Tiny weight tensors live in SMEM as flat 1-D scalars (48 + 24 f32 here).
    w_flat = W.reshape(-1).astype(jnp.float32)                # (I*H*F,)
    b_flat = b_final.reshape(-1).astype(jnp.float32)          # (I*F,)

    kernel = partial(toy_model_kernel, n_instances=I, n_hidden=H, n_features=F)

    out_ifb = pl.pallas_call(
        kernel,
        out_shape=jax.ShapeDtypeStruct((I, F, Bp), features_bif.dtype),
        grid=(Bp // TB,),
        in_specs=[
            pl.BlockSpec(memory_space=pltpu.MemorySpace.SMEM),          # W (flat)
            pl.BlockSpec(memory_space=pltpu.MemorySpace.SMEM),          # b_final (flat)
            pl.BlockSpec((I, F, TB), lambda b: (0, 0, b)),              # x block
        ],
        out_specs=pl.BlockSpec((I, F, TB), lambda b: (0, 0, b)),        # out block
        compiler_params=pltpu.CompilerParams(
            dimension_semantics=("parallel",)),
    )(w_flat, b_flat, x_ifb)

    # Back to the PyTorch layout and drop batch padding.
    return jnp.transpose(out_ifb[:, :, :B], (2, 0, 1))        # (B, I, F)


def reference_forward(features_bif, W, b_final):
    hidden = jnp.einsum("bif,ihf->bih", features_bif, W)
    out = jnp.einsum("bih,ihf->bif", hidden, W)
    return jax.nn.relu(out + b_final[None, :, :])


if __name__ == "__main__":
    # Small shapes consistent with Config defaults: n_features=6, n_hidden=2.
    batch = 256          # multiple of 128 so lanes stay fully dense
    n_instances = 4
    n_features = 6
    n_hidden = 2

    key = jax.random.PRNGKey(0)
    k_w, k_x = jax.random.split(key)

    # Deterministic parameter init (xavier_normal_ equivalent for W, zeros for b).
    xavier_std = (2.0 / (n_hidden + n_features)) ** 0.5
    W = xavier_std * jax.random.normal(
        k_w, (n_instances, n_hidden, n_features), dtype=jnp.float32)
    b_final = jnp.zeros((n_instances, n_features), dtype=jnp.float32)

    # Example input: sparse-ish 0/1 features (matches generate_batch spirit).
    features = (jax.random.uniform(
        k_x, (batch, n_instances, n_features), dtype=jnp.float32) < 0.4
    ).astype(jnp.float32)

    # block_b=128 -> grid of 2 batch blocks even at this toy batch size.
    out = toy_model_forward(features, W, b_final, block_b=128)
    out = jax.block_until_ready(out)

    ref = reference_forward(features, W, b_final)
    assert out.shape == (batch, n_instances, n_features)
    assert jnp.allclose(out, ref, atol=1e-5, rtol=1e-5), "mismatch vs reference"

    print("KERNEL_OK")
</pallas_src>

<mosaic_0001>
module attributes {stable_mosaic.version = 11 : i64} {
  func.func @toy_model_kernel(%arg0: i32, %arg1: memref<48xf32, #tpu.memory_space<smem>>, %arg2: memref<24xf32, #tpu.memory_space<smem>>, %arg3: memref<4x6x128xf32, #tpu.memory_space<vmem>>, %arg4: memref<4x6x128xf32, #tpu.memory_space<vmem>>) attributes {dimension_semantics = [#tpu.dimension_semantics<parallel>], iteration_bounds = array<i64: 2>, scalar_prefetch = 0 : i64, scratch_operands = 0 : i64, tpu.core_type = #tpu.core_type<tc>, window_params = [{transform_indices = @transform_0, window_bounds = array<i64: 48>}, {transform_indices = @transform_1, window_bounds = array<i64: 24>}, {transform_indices = @transform_2, window_bounds = array<i64: 4, 6, 128>}, {transform_indices = @transform_3, window_bounds = array<i64: 4, 6, 128>}]} {
    %c0 = arith.constant 0 : index
    %c0_0 = arith.constant 0 : index
    %c0_1 = arith.constant 0 : index
    %0 = vector.load %arg3[%c0, %c0_0, %c0_1] : memref<4x6x128xf32, #tpu.memory_space<vmem>>, vector<1x6x128xf32>
    %1 = vector.shape_cast %0 : vector<1x6x128xf32> to vector<6x128xf32>
    %c0_2 = arith.constant 0 : index
    %2 = memref.load %arg1[%c0_2] : memref<48xf32, #tpu.memory_space<smem>>
    %3 = vector.extract_strided_slice %1 {offsets = [0, 0], sizes = [1, 128], strides = [1, 1]} : vector<6x128xf32> to vector<1x128xf32>
    %4 = vector.broadcast %2 : f32 to vector<1x128xf32>
    %5 = arith.mulf %4, %3 : vector<1x128xf32>
    %c1 = arith.constant 1 : index
    %6 = memref.load %arg1[%c1] : memref<48xf32, #tpu.memory_space<smem>>
    %7 = vector.extract_strided_slice %1 {offsets = [1, 0], sizes = [1, 128], strides = [1, 1]} : vector<6x128xf32> to vector<1x128xf32>
    %8 = vector.broadcast %6 : f32 to vector<1x128xf32>
    %9 = arith.mulf %8, %7 : vector<1x128xf32>
    %10 = arith.addf %5, %9 : vector<1x128xf32>
    %c2 = arith.constant 2 : index
    %11 = memref.load %arg1[%c2] : memref<48xf32, #tpu.memory_space<smem>>
    %12 = vector.extract_strided_slice %1 {offsets = [2, 0], sizes = [1, 128], strides = [1, 1]} : vector<6x128xf32> to vector<1x128xf32>
    %13 = vector.broadcast %11 : f32 to vector<1x128xf32>
    %14 = arith.mulf %13, %12 : vector<1x128xf32>
    %15 = arith.addf %10, %14 : vector<1x128xf32>
    %c3 = arith.constant 3 : index
    %16 = memref.load %arg1[%c3] : memref<48xf32, #tpu.memory_space<smem>>
    %17 = vector.extract_strided_slice %1 {offsets = [3, 0], sizes = [1, 128], strides = [1, 1]} : vector<6x128xf32> to vector<1x128xf32>
    %18 = vector.broadcast %16 : f32 to vector<1x128xf32>
    %19 = arith.mulf %18, %17 : vector<1x128xf32>
    %20 = arith.addf %15, %19 : vector<1x128xf32>
    %c4 = arith.constant 4 : index
    %21 = memref.load %arg1[%c4] : memref<48xf32, #tpu.memory_space<smem>>
    %22 = vector.extract_strided_slice %1 {offsets = [4, 0], sizes = [1, 128], strides = [1, 1]} : vector<6x128xf32> to vector<1x128xf32>
    %23 = vector.broadcast %21 : f32 to vector<1x128xf32>
    %24 = arith.mulf %23, %22 : vector<1x128xf32>
    %25 = arith.addf %20, %24 : vector<1x128xf32>
    %c5 = arith.constant 5 : index
    %26 = memref.load %arg1[%c5] : memref<48xf32, #tpu.memory_space<smem>>
    %27 = vector.extract_strided_slice %1 {offsets = [5, 0], sizes = [1, 128], strides = [1, 1]} : vector<6x128xf32> to vector<1x128xf32>
    %28 = vector.broadcast %26 : f32 to vector<1x128xf32>
    %29 = arith.mulf %28, %27 : vector<1x128xf32>
    %30 = arith.addf %25, %29 : vector<1x128xf32>
    %c6 = arith.constant 6 : index
    %31 = memref.load %arg1[%c6] : memref<48xf32, #tpu.memory_space<smem>>
    %32 = vector.extract_strided_slice %1 {offsets = [0, 0], sizes = [1, 128], strides = [1, 1]} : vector<6x128xf32> to vector<1x128xf32>
    %33 = vector.broadcast %31 : f32 to vector<1x128xf32>
    %34 = arith.mulf %33, %32 : vector<1x128xf32>
    %c7 = arith.constant 7 : index
    %35 = memref.load %arg1[%c7] : memref<48xf32, #tpu.memory_space<smem>>
    %36 = vector.extract_strided_slice %1 {offsets = [1, 0], sizes = [1, 128], strides = [1, 1]} : vector<6x128xf32> to vector<1x128xf32>
    %37 = vector.broadcast %35 : f32 to vector<1x128xf32>
    %38 = arith.mulf %37, %36 : vector<1x128xf32>
    %39 = arith.addf %34, %38 : vector<1x128xf32>
    %c8 = arith.constant 8 : index
    %40 = memref.load %arg1[%c8] : memref<48xf32, #tpu.memory_space<smem>>
    %41 = vector.extract_strided_slice %1 {offsets = [2, 0], sizes = [1, 128], strides = [1, 1]} : vector<6x128xf32> to vector<1x128xf32>
    %42 = vector.broadcast %40 : f32 to vector<1x128xf32>
    %43 = arith.mulf %42, %41 : vector<1x128xf32>
    %44 = arith.addf %39, %43 : vector<1x128xf32>
    %c9 = arith.constant 9 : index
    %45 = memref.load %arg1[%c9] : memref<48xf32, #tpu.memory_space<smem>>
    %46 = vector.extract_strided_slice %1 {offsets = [3, 0], sizes = [1, 128], strides = [1, 1]} : vector<6x128xf32> to vector<1x128xf32>
    %47 = vector.broadcast %45 : f32 to vector<1x128xf32>
    %48 = arith.mulf %47, %46 : vector<1x128xf32>
    %49 = arith.addf %44, %48 : vector<1x128xf32>
    %c10 = arith.constant 10 : index
    %50 = memref.load %arg1[%c10] : memref<48xf32, #tpu.memory_space<smem>>
    %51 = vector.extract_strided_slice %1 {offsets = [4, 0], sizes = [1, 128], strides = [1, 1]} : vector<6x128xf32> to vector<1x128xf32>
    %52 = vector.broadcast %50 : f32 to vector<1x128xf32>
    %53 = arith.mulf %52, %51 : vector<1x128xf32>
    %54 = arith.addf %49, %53 : vector<1x128xf32>
    %c11 = arith.constant 11 : index
    %55 = memref.load %arg1[%c11] : memref<48xf32, #tpu.memory_space<smem>>
    %56 = vector.extract_strided_slice %1 {offsets = [5, 0], sizes = [1, 128], strides = [1, 1]} : vector<6x128xf32> to vector<1x128xf32>
    %57 = vector.broadcast %55 : f32 to vector<1x128xf32>
    %58 = arith.mulf %57, %56 : vector<1x128xf32>
    %59 = arith.addf %54, %58 : vector<1x128xf32>
    %c0_3 = arith.constant 0 : index
    %60 = memref.load %arg2[%c0_3] : memref<24xf32, #tpu.memory_space<smem>>
    %c0_4 = arith.constant 0 : index
    %61 = memref.load %arg1[%c0_4] : memref<48xf32, #tpu.memory_space<smem>>
    %62 = vector.broadcast %61 : f32 to vector<1x128xf32>
    %63 = arith.mulf %62, %30 : vector<1x128xf32>
    %64 = vector.broadcast %60 : f32 to vector<1x128xf32>
    %65 = arith.addf %64, %63 : vector<1x128xf32>
    %c6_5 = arith.constant 6 : index
    %66 = memref.load %arg1[%c6_5] : memref<48xf32, #tpu.memory_space<smem>>
    %67 = vector.broadcast %66 : f32 to vector<1x128xf32>
    %68 = arith.mulf %67, %59 : vector<1x128xf32>
    %69 = arith.addf %65, %68 : vector<1x128xf32>
    %cst = arith.constant 0.000000e+00 : f32
    %70 = vector.broadcast %cst : f32 to vector<1x128xf32>
    %71 = arith.maximumf %69, %70 : vector<1x128xf32>
    %c1_6 = arith.constant 1 : index
    %72 = memref.load %arg2[%c1_6] : memref<24xf32, #tpu.memory_space<smem>>
    %c1_7 = arith.constant 1 : index
    %73 = memref.load %arg1[%c1_7] : memref<48xf32, #tpu.memory_space<smem>>
    %74 = vector.broadcast %73 : f32 to vector<1x128xf32>
    %75 = arith.mulf %74, %30 : vector<1x128xf32>
    %76 = vector.broadcast %72 : f32 to vector<1x128xf32>
    %77 = arith.addf %76, %75 : vector<1x128xf32>
    %c7_8 = arith.constant 7 : index
    %78 = memref.load %arg1[%c7_8] : memref<48xf32, #tpu.memory_space<smem>>
    %79 = vector.broadcast %78 : f32 to vector<1x128xf32>
    %80 = arith.mulf %79, %59 : vector<1x128xf32>
    %81 = arith.addf %77, %80 : vector<1x128xf32>
    %cst_9 = arith.constant 0.000000e+00 : f32
    %82 = vector.broadcast %cst_9 : f32 to vector<1x128xf32>
    %83 = arith.maximumf %81, %82 : vector<1x128xf32>
    %c2_10 = arith.constant 2 : index
    %84 = memref.load %arg2[%c2_10] : memref<24xf32, #tpu.memory_space<smem>>
    %c2_11 = arith.constant 2 : index
    %85 = memref.load %arg1[%c2_11] : memref<48xf32, #tpu.memory_space<smem>>
    %86 = vector.broadcast %85 : f32 to vector<1x128xf32>
    %87 = arith.mulf %86, %30 : vector<1x128xf32>
    %88 = vector.broadcast %84 : f32 to vector<1x128xf32>
    %89 = arith.addf %88, %87 : vector<1x128xf32>
    %c8_12 = arith.constant 8 : index
    %90 = memref.load %arg1[%c8_12] : memref<48xf32, #tpu.memory_space<smem>>
    %91 = vector.broadcast %90 : f32 to vector<1x128xf32>
    %92 = arith.mulf %91, %59 : vector<1x128xf32>
    %93 = arith.addf %89, %92 : vector<1x128xf32>
    %cst_13 = arith.constant 0.000000e+00 : f32
    %94 = vector.broadcast %cst_13 : f32 to vector<1x128xf32>
    %95 = arith.maximumf %93, %94 : vector<1x128xf32>
    %c3_14 = arith.constant 3 : index
    %96 = memref.load %arg2[%c3_14] : memref<24xf32, #tpu.memory_space<smem>>
    %c3_15 = arith.constant 3 : index
    %97 = memref.load %arg1[%c3_15] : memref<48xf32, #tpu.memory_space<smem>>
    %98 = vector.broadcast %97 : f32 to vector<1x128xf32>
    %99 = arith.mulf %98, %30 : vector<1x128xf32>
    %100 = vector.broadcast %96 : f32 to vector<1x128xf32>
    %101 = arith.addf %100, %99 : vector<1x128xf32>
    %c9_16 = arith.constant 9 : index
    %102 = memref.load %arg1[%c9_16] : memref<48xf32, #tpu.memory_space<smem>>
    %103 = vector.broadcast %102 : f32 to vector<1x128xf32>
    %104 = arith.mulf %103, %59 : vector<1x128xf32>
    %105 = arith.addf %101, %104 : vector<1x128xf32>
    %cst_17 = arith.constant 0.000000e+00 : f32
    %106 = vector.broadcast %cst_17 : f32 to vector<1x128xf32>
    %107 = arith.maximumf %105, %106 : vector<1x128xf32>
    %c4_18 = arith.constant 4 : index
    %108 = memref.load %arg2[%c4_18] : memref<24xf32, #tpu.memory_space<smem>>
    %c4_19 = arith.constant 4 : index
    %109 = memref.load %arg1[%c4_19] : memref<48xf32, #tpu.memory_space<smem>>
    %110 = vector.broadcast %109 : f32 to vector<1x128xf32>
    %111 = arith.mulf %110, %30 : vector<1x128xf32>
    %112 = vector.broadcast %108 : f32 to vector<1x128xf32>
    %113 = arith.addf %112, %111 : vector<1x128xf32>
    %c10_20 = arith.constant 10 : index
    %114 = memref.load %arg1[%c10_20] : memref<48xf32, #tpu.memory_space<smem>>
    %115 = vector.broadcast %114 : f32 to vector<1x128xf32>
    %116 = arith.mulf %115, %59 : vector<1x128xf32>
    %117 = arith.addf %113, %116 : vector<1x128xf32>
    %cst_21 = arith.constant 0.000000e+00 : f32
    %118 = vector.broadcast %cst_21 : f32 to vector<1x128xf32>
    %119 = arith.maximumf %117, %118 : vector<1x128xf32>
    %c5_22 = arith.constant 5 : index
    %120 = memref.load %arg2[%c5_22] : memref<24xf32, #tpu.memory_space<smem>>
    %c5_23 = arith.constant 5 : index
    %121 = memref.load %arg1[%c5_23] : memref<48xf32, #tpu.memory_space<smem>>
    %122 = vector.broadcast %121 : f32 to vector<1x128xf32>
    %123 = arith.mulf %122, %30 : vector<1x128xf32>
    %124 = vector.broadcast %120 : f32 to vector<1x128xf32>
    %125 = arith.addf %124, %123 : vector<1x128xf32>
    %c11_24 = arith.constant 11 : index
    %126 = memref.load %arg1[%c11_24] : memref<48xf32, #tpu.memory_space<smem>>
    %127 = vector.broadcast %126 : f32 to vector<1x128xf32>
    %128 = arith.mulf %127, %59 : vector<1x128xf32>
    %129 = arith.addf %125, %128 : vector<1x128xf32>
    %cst_25 = arith.constant 0.000000e+00 : f32
    %130 = vector.broadcast %cst_25 : f32 to vector<1x128xf32>
    %131 = arith.maximumf %129, %130 : vector<1x128xf32>
    %132 = tpu.concatenate %71, %83, %95, %107, %119, %131 in 0 : vector<1x128xf32>, vector<1x128xf32>, vector<1x128xf32>, vector<1x128xf32>, vector<1x128xf32>, vector<1x128xf32> -> vector<6x128xf32>
    %c0_26 = arith.constant 0 : index
    %c0_27 = arith.constant 0 : index
    %c0_28 = arith.constant 0 : index
    %133 = vector.load %arg4[%c0_26, %c0_27, %c0_28] : memref<4x6x128xf32, #tpu.memory_space<vmem>>, vector<1x6x128xf32>
    %134 = vector.shape_cast %133 : vector<1x6x128xf32> to vector<6x128xf32>
    %135 = vector.shape_cast %132 : vector<6x128xf32> to vector<1x6x128xf32>
    tpu.vector_store %arg4[%c0_26, %c0_27, %c0_28], %135 {strides = array<i32>} : memref<4x6x128xf32, #tpu.memory_space<vmem>>, vector<1x6x128xf32>,
    %c1_29 = arith.constant 1 : index
    %c0_30 = arith.constant 0 : index
    %c0_31 = arith.constant 0 : index
    %136 = vector.load %arg3[%c1_29, %c0_30, %c0_31] : memref<4x6x128xf32, #tpu.memory_space<vmem>>, vector<1x6x128xf32>
    %137 = vector.shape_cast %136 : vector<1x6x128xf32> to vector<6x128xf32>
    %c12 = arith.constant 12 : index
    %138 = memref.load %arg1[%c12] : memref<48xf32, #tpu.memory_space<smem>>
    %139 = vector.extract_strided_slice %137 {offsets = [0, 0], sizes = [1, 128], strides = [1, 1]} : vector<6x128xf32> to vector<1x128xf32>
    %140 = vector.broadcast %138 : f32 to vector<1x128xf32>
    %141 = arith.mulf %140, %139 : vector<1x128xf32>
    %c13 = arith.constant 13 : index
    %142 = memref.load %arg1[%c13] : memref<48xf32, #tpu.memory_space<smem>>
    %143 = vector.extract_strided_slice %137 {offsets = [1, 0], sizes = [1, 128], strides = [1, 1]} : vector<6x128xf32> to vector<1x128xf32>
    %144 = vector.broadcast %142 : f32 to vector<1x128xf32>
    %145 = arith.mulf %144, %143 : vector<1x128xf32>
    %146 = arith.addf %141, %145 : vector<1x128xf32>
    %c14 = arith.constant 14 : index
    %147 = memref.load %arg1[%c14] : memref<48xf32, #tpu.memory_space<smem>>
    %148 = vector.extract_strided_slice %137 {offsets = [2, 0], sizes = [1, 128], strides = [1, 1]} : vector<6x128xf32> to vector<1x128xf32>
    %149 = vector.broadcast %147 : f32 to vector<1x128xf32>
    %150 = arith.mulf %149, %148 : vector<1x128xf32>
    %151 = arith.addf %146, %150 : vector<1x128xf32>
    %c15 = arith.constant 15 : index
    %152 = memref.load %arg1[%c15] : memref<48xf32, #tpu.memory_space<smem>>
    %153 = vector.extract_strided_slice %137 {offsets = [3, 0], sizes = [1, 128], strides = [1, 1]} : vector<6x128xf32> to vector<1x128xf32>
    %154 = vector.broadcast %152 : f32 to vector<1x128xf32>
    %155 = arith.mulf %154, %153 : vector<1x128xf32>
    %156 = arith.addf %151, %155 : vector<1x128xf32>
    %c16 = arith.constant 16 : index
    %157 = memref.load %arg1[%c16] : memref<48xf32, #tpu.memory_space<smem>>
    %158 = vector.extract_strided_slice %137 {offsets = [4, 0], sizes = [1, 128], strides = [1, 1]} : vector<6x128xf32> to vector<1x128xf32>
    %159 = vector.broadcast %157 : f32 to vector<1x128xf32>
    %160 = arith.mulf %159, %158 : vector<1x128xf32>
    %161 = arith.addf %156, %160 : vector<1x128xf32>
    %c17 = arith.constant 17 : index
    %162 = memref.load %arg1[%c17] : memref<48xf32, #tpu.memory_space<smem>>
    %163 = vector.extract_strided_slice %137 {offsets = [5, 0], sizes = [1, 128], strides = [1, 1]} : vector<6x128xf32> to vector<1x128xf32>
    %164 = vector.broadcast %162 : f32 to vector<1x128xf32>
    %165 = arith.mulf %164, %163 : vector<1x128xf32>
    %166 = arith.addf %161, %165 : vector<1x128xf32>
    %c18 = arith.constant 18 : index
    %167 = memref.load %arg1[%c18] : memref<48xf32, #tpu.memory_space<smem>>
    %168 = vector.extract_strided_slice %137 {offsets = [0, 0], sizes = [1, 128], strides = [1, 1]} : vector<6x128xf32> to vector<1x128xf32>
    %169 = vector.broadcast %167 : f32 to vector<1x128xf32>
    %170 = arith.mulf %169, %168 : vector<1x128xf32>
    %c19 = arith.constant 19 : index
    %171 = memref.load %arg1[%c19] : memref<48xf32, #tpu.memory_space<smem>>
    %172 = vector.extract_strided_slice %137 {offsets = [1, 0], sizes = [1, 128], strides = [1, 1]} : vector<6x128xf32> to vector<1x128xf32>
    %173 = vector.broadcast %171 : f32 to vector<1x128xf32>
    %174 = arith.mulf %173, %172 : vector<1x128xf32>
    %175 = arith.addf %170, %174 : vector<1x128xf32>
    %c20 = arith.constant 20 : index
    %176 = memref.load %arg1[%c20] : memref<48xf32, #tpu.memory_space<smem>>
    %177 = vector.extract_strided_slice %137 {offsets = [2, 0], sizes = [1, 128], strides = [1, 1]} : vector<6x128xf32> to vector<1x128xf32>
    %178 = vector.broadcast %176 : f32 to vector<1x128xf32>
    %179 = arith.mulf %178, %177 : vector<1x128xf32>
    %180 = arith.addf %175, %179 : vector<1x128xf32>
    %c21 = arith.constant 21 : index
    %181 = memref.load %arg1[%c21] : memref<48xf32, #tpu.memory_space<smem>>
    %182 = vector.extract_strided_slice %137 {offsets = [3, 0], sizes = [1, 128], strides = [1, 1]} : vector<6x128xf32> to vector<1x128xf32>
    %183 = vector.broadcast %181 : f32 to vector<1x128xf32>
    %184 = arith.mulf %183, %182 : vector<1x128xf32>
    %185 = arith.addf %180, %184 : vector<1x128xf32>
    %c22 = arith.constant 22 : index
    %186 = memref.load %arg1[%c22] : memref<48xf32, #tpu.memory_space<smem>>
    %187 = vector.extract_strided_slice %137 {offsets = [4, 0], sizes = [1, 128], strides = [1, 1]} : vector<6x128xf32> to vector<1x128xf32>
    %188 = vector.broadcast %186 : f32 to vector<1x128xf32>
    %189 = arith.mulf %188, %187 : vector<1x128xf32>
    %190 = arith.addf %185, %189 : vector<1x128xf32>
    %c23 = arith.constant 23 : index
    %191 = memref.load %arg1[%c23] : memref<48xf32, #tpu.memory_space<smem>>
    %192 = vector.extract_strided_slice %137 {offsets = [5, 0], sizes = [1, 128], strides = [1, 1]} : vector<6x128xf32> to vector<1x128xf32>
    %193 = vector.broadcast %191 : f32 to vector<1x128xf32>
    %194 = arith.mulf %193, %192 : vector<1x128xf32>
    %195 = arith.addf %190, %194 : vector<1x128xf32>
    %c6_32 = arith.constant 6 : index
    %196 = memref.load %arg2[%c6_32] : memref<24xf32, #tpu.memory_space<smem>>
    %c12_33 = arith.constant 12 : index
    %197 = memref.load %arg1[%c12_33] : memref<48xf32, #tpu.memory_space<smem>>
    %198 = vector.broadcast %197 : f32 to vector<1x128xf32>
    %199 = arith.mulf %198, %166 : vector<1x128xf32>
    %200 = vector.broadcast %196 : f32 to vector<1x128xf32>
    %201 = arith.addf %200, %199 : vector<1x128xf32>
    %c18_34 = arith.constant 18 : index
    %202 = memref.load %arg1[%c18_34] : memref<48xf32, #tpu.memory_space<smem>>
    %203 = vector.broadcast %202 : f32 to vector<1x128xf32>
    %204 = arith.mulf %203, %195 : vector<1x128xf32>
    %205 = arith.addf %201, %204 : vector<1x128xf32>
    %cst_35 = arith.constant 0.000000e+00 : f32
    %206 = vector.broadcast %cst_35 : f32 to vector<1x128xf32>
    %207 = arith.maximumf %205, %206 : vector<1x128xf32>
    %c7_36 = arith.constant 7 : index
    %208 = memref.load %arg2[%c7_36] : memref<24xf32, #tpu.memory_space<smem>>
    %c13_37 = arith.constant 13 : index
    %209 = memref.load %arg1[%c13_37] : memref<48xf32, #tpu.memory_space<smem>>
    %210 = vector.broadcast %209 : f32 to vector<1x128xf32>
    %211 = arith.mulf %210, %166 : vector<1x128xf32>
    %212 = vector.broadcast %208 : f32 to vector<1x128xf32>
    %213 = arith.addf %212, %211 : vector<1x128xf32>
    %c19_38 = arith.constant 19 : index
    %214 = memref.load %arg1[%c19_38] : memref<48xf32, #tpu.memory_space<smem>>
    %215 = vector.broadcast %214 : f32 to vector<1x128xf32>
    %216 = arith.mulf %215, %195 : vector<1x128xf32>
    %217 = arith.addf %213, %216 : vector<1x128xf32>
    %cst_39 = arith.constant 0.000000e+00 : f32
    %218 = vector.broadcast %cst_39 : f32 to vector<1x128xf32>
    %219 = arith.maximumf %217, %218 : vector<1x128xf32>
    %c8_40 = arith.constant 8 : index
    %220 = memref.load %arg2[%c8_40] : memref<24xf32, #tpu.memory_space<smem>>
    %c14_41 = arith.constant 14 : index
    %221 = memref.load %arg1[%c14_41] : memref<48xf32, #tpu.memory_space<smem>>
    %222 = vector.broadcast %221 : f32 to vector<1x128xf32>
    %223 = arith.mulf %222, %166 : vector<1x128xf32>
    %224 = vector.broadcast %220 : f32 to vector<1x128xf32>
    %225 = arith.addf %224, %223 : vector<1x128xf32>
    %c20_42 = arith.constant 20 : index
    %226 = memref.load %arg1[%c20_42] : memref<48xf32, #tpu.memory_space<smem>>
    %227 = vector.broadcast %226 : f32 to vector<1x128xf32>
    %228 = arith.mulf %227, %195 : vector<1x128xf32>
    %229 = arith.addf %225, %228 : vector<1x128xf32>
    %cst_43 = arith.constant 0.000000e+00 : f32
    %230 = vector.broadcast %cst_43 : f32 to vector<1x128xf32>
    %231 = arith.maximumf %229, %230 : vector<1x128xf32>
    %c9_44 = arith.constant 9 : index
    %232 = memref.load %arg2[%c9_44] : memref<24xf32, #tpu.memory_space<smem>>
    %c15_45 = arith.constant 15 : index
    %233 = memref.load %arg1[%c15_45] : memref<48xf32, #tpu.memory_space<smem>>
    %234 = vector.broadcast %233 : f32 to vector<1x128xf32>
    %235 = arith.mulf %234, %166 : vector<1x128xf32>
    %236 = vector.broadcast %232 : f32 to vector<1x128xf32>
    %237 = arith.addf %236, %235 : vector<1x128xf32>
    %c21_46 = arith.constant 21 : index
    %238 = memref.load %arg1[%c21_46] : memref<48xf32, #tpu.memory_space<smem>>
    %239 = vector.broadcast %238 : f32 to vector<1x128xf32>
    %240 = arith.mulf %239, %195 : vector<1x128xf32>
    %241 = arith.addf %237, %240 : vector<1x128xf32>
    %cst_47 = arith.constant 0.000000e+00 : f32
    %242 = vector.broadcast %cst_47 : f32 to vector<1x128xf32>
    %243 = arith.maximumf %241, %242 : vector<1x128xf32>
    %c10_48 = arith.constant 10 : index
    %244 = memref.load %arg2[%c10_48] : memref<24xf32, #tpu.memory_space<smem>>
    %c16_49 = arith.constant 16 : index
    %245 = memref.load %arg1[%c16_49] : memref<48xf32, #tpu.memory_space<smem>>
    %246 = vector.broadcast %245 : f32 to vector<1x128xf32>
    %247 = arith.mulf %246, %166 : vector<1x128xf32>
    %248 = vector.broadcast %244 : f32 to vector<1x128xf32>
    %249 = arith.addf %248, %247 : vector<1x128xf32>
    %c22_50 = arith.constant 22 : index
    %250 = memref.load %arg1[%c22_50] : memref<48xf32, #tpu.memory_space<smem>>
    %251 = vector.broadcast %250 : f32 to vector<1x128xf32>
    %252 = arith.mulf %251, %195 : vector<1x128xf32>
    %253 = arith.addf %249, %252 : vector<1x128xf32>
    %cst_51 = arith.constant 0.000000e+00 : f32
    %254 = vector.broadcast %cst_51 : f32 to vector<1x128xf32>
    %255 = arith.maximumf %253, %254 : vector<1x128xf32>
    %c11_52 = arith.constant 11 : index
    %256 = memref.load %arg2[%c11_52] : memref<24xf32, #tpu.memory_space<smem>>
    %c17_53 = arith.constant 17 : index
    %257 = memref.load %arg1[%c17_53] : memref<48xf32, #tpu.memory_space<smem>>
    %258 = vector.broadcast %257 : f32 to vector<1x128xf32>
    %259 = arith.mulf %258, %166 : vector<1x128xf32>
    %260 = vector.broadcast %256 : f32 to vector<1x128xf32>
    %261 = arith.addf %260, %259 : vector<1x128xf32>
    %c23_54 = arith.constant 23 : index
    %262 = memref.load %arg1[%c23_54] : memref<48xf32, #tpu.memory_space<smem>>
    %263 = vector.broadcast %262 : f32 to vector<1x128xf32>
    %264 = arith.mulf %263, %195 : vector<1x128xf32>
    %265 = arith.addf %261, %264 : vector<1x128xf32>
    %cst_55 = arith.constant 0.000000e+00 : f32
    %266 = vector.broadcast %cst_55 : f32 to vector<1x128xf32>
    %267 = arith.maximumf %265, %266 : vector<1x128xf32>
    %268 = tpu.concatenate %207, %219, %231, %243, %255, %267 in 0 : vector<1x128xf32>, vector<1x128xf32>, vector<1x128xf32>, vector<1x128xf32>, vector<1x128xf32>, vector<1x128xf32> -> vector<6x128xf32>
    %c1_56 = arith.constant 1 : index
    %c0_57 = arith.constant 0 : index
    %c0_58 = arith.constant 0 : index
    %269 = vector.load %arg4[%c1_56, %c0_57, %c0_58] : memref<4x6x128xf32, #tpu.memory_space<vmem>>, vector<1x6x128xf32>
    %270 = vector.shape_cast %269 : vector<1x6x128xf32> to vector<6x128xf32>
    %271 = vector.shape_cast %268 : vector<6x128xf32> to vector<1x6x128xf32>
    tpu.vector_store %arg4[%c1_56, %c0_57, %c0_58], %271 {strides = array<i32>} : memref<4x6x128xf32, #tpu.memory_space<vmem>>, vector<1x6x128xf32>,
    %c2_59 = arith.constant 2 : index
    %c0_60 = arith.constant 0 : index
    %c0_61 = arith.constant 0 : index
    %272 = vector.load %arg3[%c2_59, %c0_60, %c0_61] : memref<4x6x128xf32, #tpu.memory_space<vmem>>, vector<1x6x128xf32>
    %273 = vector.shape_cast %272 : vector<1x6x128xf32> to vector<6x128xf32>
    %c24 = arith.constant 24 : index
    %274 = memref.load %arg1[%c24] : memref<48xf32, #tpu.memory_space<smem>>
    %275 = vector.extract_strided_slice %273 {offsets = [0, 0], sizes = [1, 128], strides = [1, 1]} : vector<6x128xf32> to vector<1x128xf32>
    %276 = vector.broadcast %274 : f32 to vector<1x128xf32>
    %277 = arith.mulf %276, %275 : vector<1x128xf32>
    %c25 = arith.constant 25 : index
    %278 = memref.load %arg1[%c25] : memref<48xf32, #tpu.memory_space<smem>>
    %279 = vector.extract_strided_slice %273 {offsets = [1, 0], sizes = [1, 128], strides = [1, 1]} : vector<6x128xf32> to vector<1x128xf32>
    %280 = vector.broadcast %278 : f32 to vector<1x128xf32>
    %281 = arith.mulf %280, %279 : vector<1x128xf32>
    %282 = arith.addf %277, %281 : vector<1x128xf32>
    %c26 = arith.constant 26 : index
    %283 = memref.load %arg1[%c26] : memref<48xf32, #tpu.memory_space<smem>>
    %284 = vector.extract_strided_slice %273 {offsets = [2, 0], sizes = [1, 128], strides = [1, 1]} : vector<6x128xf32> to vector<1x128xf32>
    %285 = vector.broadcast %283 : f32 to vector<1x128xf32>
    %286 = arith.mulf %285, %284 : vector<1x128xf32>
    %287 = arith.addf %282, %286 : vector<1x128xf32>
    %c27 = arith.constant 27 : index
    %288 = memref.load %arg1[%c27] : memref<48xf32, #tpu.memory_space<smem>>
    %289 = vector.extract_strided_slice %273 {offsets = [3, 0], sizes = [1, 128], strides = [1, 1]} : vector<6x128xf32> to vector<1x128xf32>
    %290 = vector.broadcast %288 : f32 to vector<1x128xf32>
    %291 = arith.mulf %290, %289 : vector<1x128xf32>
    %292 = arith.addf %287, %291 : vector<1x128xf32>
    %c28 = arith.constant 28 : index
    %293 = memref.load %arg1[%c28] : memref<48xf32, #tpu.memory_space<smem>>
    %294 = vector.extract_strided_slice %273 {offsets = [4, 0], sizes = [1, 128], strides = [1, 1]} : vector<6x128xf32> to vector<1x128xf32>
    %295 = vector.broadcast %293 : f32 to vector<1x128xf32>
    %296 = arith.mulf %295, %294 : vector<1x128xf32>
    %297 = arith.addf %292, %296 : vector<1x128xf32>
    %c29 = arith.constant 29 : index
    %298 = memref.load %arg1[%c29] : memref<48xf32, #tpu.memory_space<smem>>
    %299 = vector.extract_strided_slice %273 {offsets = [5, 0], sizes = [1, 128], strides = [1, 1]} : vector<6x128xf32> to vector<1x128xf32>
    %300 = vector.broadcast %298 : f32 to vector<1x128xf32>
    %301 = arith.mulf %300, %299 : vector<1x128xf32>
    %302 = arith.addf %297, %301 : vector<1x128xf32>
    %c30 = arith.constant 30 : index
    %303 = memref.load %arg1[%c30] : memref<48xf32, #tpu.memory_space<smem>>
    %304 = vector.extract_strided_slice %273 {offsets = [0, 0], sizes = [1, 128], strides = [1, 1]} : vector<6x128xf32> to vector<1x128xf32>
    %305 = vector.broadcast %303 : f32 to vector<1x128xf32>
    %306 = arith.mulf %305, %304 : vector<1x128xf32>
    %c31 = arith.constant 31 : index
    %307 = memref.load %arg1[%c31] : memref<48xf32, #tpu.memory_space<smem>>
    %308 = vector.extract_strided_slice %273 {offsets = [1, 0], sizes = [1, 128], strides = [1, 1]} : vector<6x128xf32> to vector<1x128xf32>
    %309 = vector.broadcast %307 : f32 to vector<1x128xf32>
    %310 = arith.mulf %309, %308 : vector<1x128xf32>
    %311 = arith.addf %306, %310 : vector<1x128xf32>
    %c32 = arith.constant 32 : index
    %312 = memref.load %arg1[%c32] : memref<48xf32, #tpu.memory_space<smem>>
    %313 = vector.extract_strided_slice %273 {offsets = [2, 0], sizes = [1, 128], strides = [1, 1]} : vector<6x128xf32> to vector<1x128xf32>
    %314 = vector.broadcast %312 : f32 to vector<1x128xf32>
    %315 = arith.mulf %314, %313 : vector<1x128xf32>
    %316 = arith.addf %311, %315 : vector<1x128xf32>
    %c33 = arith.constant 33 : index
    %317 = memref.load %arg1[%c33] : memref<48xf32, #tpu.memory_space<smem>>
    %318 = vector.extract_strided_slice %273 {offsets = [3, 0], sizes = [1, 128], strides = [1, 1]} : vector<6x128xf32> to vector<1x128xf32>
    %319 = vector.broadcast %317 : f32 to vector<1x128xf32>
    %320 = arith.mulf %319, %318 : vector<1x128xf32>
    %321 = arith.addf %316, %320 : vector<1x128xf32>
    %c34 = arith.constant 34 : index
    %322 = memref.load %arg1[%c34] : memref<48xf32, #tpu.memory_space<smem>>
    %323 = vector.extract_strided_slice %273 {offsets = [4, 0], sizes = [1, 128], strides = [1, 1]} : vector<6x128xf32> to vector<1x128xf32>
    %324 = vector.broadcast %322 : f32 to vector<1x128xf32>
    %325 = arith.mulf %324, %323 : vector<1x128xf32>
    %326 = arith.addf %321, %325 : vector<1x128xf32>
    %c35 = arith.constant 35 : index
    %327 = memref.load %arg1[%c35] : memref<48xf32, #tpu.memory_space<smem>>
    %328 = vector.extract_strided_slice %273 {offsets = [5, 0], sizes = [1, 128], strides = [1, 1]} : vector<6x128xf32> to vector<1x128xf32>
    %329 = vector.broadcast %327 : f32 to vector<1x128xf32>
    %330 = arith.mulf %329, %328 : vector<1x128xf32>
    %331 = arith.addf %326, %330 : vector<1x128xf32>
    %c12_62 = arith.constant 12 : index
    %332 = memref.load %arg2[%c12_62] : memref<24xf32, #tpu.memory_space<smem>>
    %c24_63 = arith.constant 24 : index
    %333 = memref.load %arg1[%c24_63] : memref<48xf32, #tpu.memory_space<smem>>
    %334 = vector.broadcast %333 : f32 to vector<1x128xf32>
    %335 = arith.mulf %334, %302 : vector<1x128xf32>
    %336 = vector.broadcast %332 : f32 to vector<1x128xf32>
    %337 = arith.addf %336, %335 : vector<1x128xf32>
    %c30_64 = arith.constant 30 : index
    %338 = memref.load %arg1[%c30_64] : memref<48xf32, #tpu.memory_space<smem>>
    %339 = vector.broadcast %338 : f32 to vector<1x128xf32>
    %340 = arith.mulf %339, %331 : vector<1x128xf32>
    %341 = arith.addf %337, %340 : vector<1x128xf32>
    %cst_65 = arith.constant 0.000000e+00 : f32
    %342 = vector.broadcast %cst_65 : f32 to vector<1x128xf32>
    %343 = arith.maximumf %341, %342 : vector<1x128xf32>
    %c13_66 = arith.constant 13 : index
    %344 = memref.load %arg2[%c13_66] : memref<24xf32, #tpu.memory_space<smem>>
    %c25_67 = arith.constant 25 : index
    %345 = memref.load %arg1[%c25_67] : memref<48xf32, #tpu.memory_space<smem>>
    %346 = vector.broadcast %345 : f32 to vector<1x128xf32>
    %347 = arith.mulf %346, %302 : vector<1x128xf32>
    %348 = vector.broadcast %344 : f32 to vector<1x128xf32>
    %349 = arith.addf %348, %347 : vector<1x128xf32>
    %c31_68 = arith.constant 31 : index
    %350 = memref.load %arg1[%c31_68] : memref<48xf32, #tpu.memory_space<smem>>
    %351 = vector.broadcast %350 : f32 to vector<1x128xf32>
    %352 = arith.mulf %351, %331 : vector<1x128xf32>
    %353 = arith.addf %349, %352 : vector<1x128xf32>
    %cst_69 = arith.constant 0.000000e+00 : f32
    %354 = vector.broadcast %cst_69 : f32 to vector<1x128xf32>
    %355 = arith.maximumf %353, %354 : vector<1x128xf32>
    %c14_70 = arith.constant 14 : index
    %356 = memref.load %arg2[%c14_70] : memref<24xf32, #tpu.memory_space<smem>>
    %c26_71 = arith.constant 26 : index
    %357 = memref.load %arg1[%c26_71] : memref<48xf32, #tpu.memory_space<smem>>
    %358 = vector.broadcast %357 : f32 to vector<1x128xf32>
    %359 = arith.mulf %358, %302 : vector<1x128xf32>
    %360 = vector.broadcast %356 : f32 to vector<1x128xf32>
    %361 = arith.addf %360, %359 : vector<1x128xf32>
    %c32_72 = arith.constant 32 : index
    %362 = memref.load %arg1[%c32_72] : memref<48xf32, #tpu.memory_space<smem>>
    %363 = vector.broadcast %362 : f32 to vector<1x128xf32>
    %364 = arith.mulf %363, %331 : vector<1x128xf32>
    %365 = arith.addf %361, %364 : vector<1x128xf32>
    %cst_73 = arith.constant 0.000000e+00 : f32
    %366 = vector.broadcast %cst_73 : f32 to vector<1x128xf32>
    %367 = arith.maximumf %365, %366 : vector<1x128xf32>
    %c15_74 = arith.constant 15 : index
    %368 = memref.load %arg2[%c15_74] : memref<24xf32, #tpu.memory_space<smem>>
    %c27_75 = arith.constant 27 : index
    %369 = memref.load %arg1[%c27_75] : memref<48xf32, #tpu.memory_space<smem>>
    %370 = vector.broadcast %369 : f32 to vector<1x128xf32>
    %371 = arith.mulf %370, %302 : vector<1x128xf32>
    %372 = vector.broadcast %368 : f32 to vector<1x128xf32>
    %373 = arith.addf %372, %371 : vector<1x128xf32>
    %c33_76 = arith.constant 33 : index
    %374 = memref.load %arg1[%c33_76] : memref<48xf32, #tpu.memory_space<smem>>
    %375 = vector.broadcast %374 : f32 to vector<1x128xf32>
    %376 = arith.mulf %375, %331 : vector<1x128xf32>
    %377 = arith.addf %373, %376 : vector<1x128xf32>
    %cst_77 = arith.constant 0.000000e+00 : f32
    %378 = vector.broadcast %cst_77 : f32 to vector<1x128xf32>
    %379 = arith.maximumf %377, %378 : vector<1x128xf32>
    %c16_78 = arith.constant 16 : index
    %380 = memref.load %arg2[%c16_78] : memref<24xf32, #tpu.memory_space<smem>>
    %c28_79 = arith.constant 28 : index
    %381 = memref.load %arg1[%c28_79] : memref<48xf32, #tpu.memory_space<smem>>
    %382 = vector.broadcast %381 : f32 to vector<1x128xf32>
    %383 = arith.mulf %382, %302 : vector<1x128xf32>
    %384 = vector.broadcast %380 : f32 to vector<1x128xf32>
    %385 = arith.addf %384, %383 : vector<1x128xf32>
    %c34_80 = arith.constant 34 : index
    %386 = memref.load %arg1[%c34_80] : memref<48xf32, #tpu.memory_space<smem>>
    %387 = vector.broadcast %386 : f32 to vector<1x128xf32>
    %388 = arith.mulf %387, %331 : vector<1x128xf32>
    %389 = arith.addf %385, %388 : vector<1x128xf32>
    %cst_81 = arith.constant 0.000000e+00 : f32
    %390 = vector.broadcast %cst_81 : f32 to vector<1x128xf32>
    %391 = arith.maximumf %389, %390 : vector<1x128xf32>
    %c17_82 = arith.constant 17 : index
    %392 = memref.load %arg2[%c17_82] : memref<24xf32, #tpu.memory_space<smem>>
    %c29_83 = arith.constant 29 : index
    %393 = memref.load %arg1[%c29_83] : memref<48xf32, #tpu.memory_space<smem>>
    %394 = vector.broadcast %393 : f32 to vector<1x128xf32>
    %395 = arith.mulf %394, %302 : vector<1x128xf32>
    %396 = vector.broadcast %392 : f32 to vector<1x128xf32>
    %397 = arith.addf %396, %395 : vector<1x128xf32>
    %c35_84 = arith.constant 35 : index
    %398 = memref.load %arg1[%c35_84] : memref<48xf32, #tpu.memory_space<smem>>
    %399 = vector.broadcast %398 : f32 to vector<1x128xf32>
    %400 = arith.mulf %399, %331 : vector<1x128xf32>
    %401 = arith.addf %397, %400 : vector<1x128xf32>
    %cst_85 = arith.constant 0.000000e+00 : f32
    %402 = vector.broadcast %cst_85 : f32 to vector<1x128xf32>
    %403 = arith.maximumf %401, %402 : vector<1x128xf32>
    %404 = tpu.concatenate %343, %355, %367, %379, %391, %403 in 0 : vector<1x128xf32>, vector<1x128xf32>, vector<1x128xf32>, vector<1x128xf32>, vector<1x128xf32>, vector<1x128xf32> -> vector<6x128xf32>
    %c2_86 = arith.constant 2 : index
    %c0_87 = arith.constant 0 : index
    %c0_88 = arith.constant 0 : index
    %405 = vector.load %arg4[%c2_86, %c0_87, %c0_88] : memref<4x6x128xf32, #tpu.memory_space<vmem>>, vector<1x6x128xf32>
    %406 = vector.shape_cast %405 : vector<1x6x128xf32> to vector<6x128xf32>
    %407 = vector.shape_cast %404 : vector<6x128xf32> to vector<1x6x128xf32>
    tpu.vector_store %arg4[%c2_86, %c0_87, %c0_88], %407 {strides = array<i32>} : memref<4x6x128xf32, #tpu.memory_space<vmem>>, vector<1x6x128xf32>,
    %c3_89 = arith.constant 3 : index
    %c0_90 = arith.constant 0 : index
    %c0_91 = arith.constant 0 : index
    %408 = vector.load %arg3[%c3_89, %c0_90, %c0_91] : memref<4x6x128xf32, #tpu.memory_space<vmem>>, vector<1x6x128xf32>
    %409 = vector.shape_cast %408 : vector<1x6x128xf32> to vector<6x128xf32>
    %c36 = arith.constant 36 : index
    %410 = memref.load %arg1[%c36] : memref<48xf32, #tpu.memory_space<smem>>
    %411 = vector.extract_strided_slice %409 {offsets = [0, 0], sizes = [1, 128], strides = [1, 1]} : vector<6x128xf32> to vector<1x128xf32>
    %412 = vector.broadcast %410 : f32 to vector<1x128xf32>
    %413 = arith.mulf %412, %411 : vector<1x128xf32>
    %c37 = arith.constant 37 : index
    %414 = memref.load %arg1[%c37] : memref<48xf32, #tpu.memory_space<smem>>
    %415 = vector.extract_strided_slice %409 {offsets = [1, 0], sizes = [1, 128], strides = [1, 1]} : vector<6x128xf32> to vector<1x128xf32>
    %416 = vector.broadcast %414 : f32 to vector<1x128xf32>
    %417 = arith.mulf %416, %415 : vector<1x128xf32>
    %418 = arith.addf %413, %417 : vector<1x128xf32>
    %c38 = arith.constant 38 : index
    %419 = memref.load %arg1[%c38] : memref<48xf32, #tpu.memory_space<smem>>
    %420 = vector.extract_strided_slice %409 {offsets = [2, 0], sizes = [1, 128], strides = [1, 1]} : vector<6x128xf32> to vector<1x128xf32>
    %421 = vector.broadcast %419 : f32 to vector<1x128xf32>
    %422 = arith.mulf %421, %420 : vector<1x128xf32>
    %423 = arith.addf %418, %422 : vector<1x128xf32>
    %c39 = arith.constant 39 : index
    %424 = memref.load %arg1[%c39] : memref<48xf32, #tpu.memory_space<smem>>
    %425 = vector.extract_strided_slice %409 {offsets = [3, 0], sizes = [1, 128], strides = [1, 1]} : vector<6x128xf32> to vector<1x128xf32>
    %426 = vector.broadcast %424 : f32 to vector<1x128xf32>
    %427 = arith.mulf %426, %425 : vector<1x128xf32>
    %428 = arith.addf %423, %427 : vector<1x128xf32>
    %c40 = arith.constant 40 : index
    %429 = memref.load %arg1[%c40] : memref<48xf32, #tpu.memory_space<smem>>
    %430 = vector.extract_strided_slice %409 {offsets = [4, 0], sizes = [1, 128], strides = [1, 1]} : vector<6x128xf32> to vector<1x128xf32>
    %431 = vector.broadcast %429 : f32 to vector<1x128xf32>
    %432 = arith.mulf %431, %430 : vector<1x128xf32>
    %433 = arith.addf %428, %432 : vector<1x128xf32>
    %c41 = arith.constant 41 : index
    %434 = memref.load %arg1[%c41] : memref<48xf32, #tpu.memory_space<smem>>
    %435 = vector.extract_strided_slice %409 {offsets = [5, 0], sizes = [1, 128], strides = [1, 1]} : vector<6x128xf32> to vector<1x128xf32>
    %436 = vector.broadcast %434 : f32 to vector<1x128xf32>
    %437 = arith.mulf %436, %435 : vector<1x128xf32>
    %438 = arith.addf %433, %437 : vector<1x128xf32>
    %c42 = arith.constant 42 : index
    %439 = memref.load %arg1[%c42] : memref<48xf32, #tpu.memory_space<smem>>
    %440 = vector.extract_strided_slice %409 {offsets = [0, 0], sizes = [1, 128], strides = [1, 1]} : vector<6x128xf32> to vector<1x128xf32>
    %441 = vector.broadcast %439 : f32 to vector<1x128xf32>
    %442 = arith.mulf %441, %440 : vector<1x128xf32>
    %c43 = arith.constant 43 : index
    %443 = memref.load %arg1[%c43] : memref<48xf32, #tpu.memory_space<smem>>
    %444 = vector.extract_strided_slice %409 {offsets = [1, 0], sizes = [1, 128], strides = [1, 1]} : vector<6x128xf32> to vector<1x128xf32>
    %445 = vector.broadcast %443 : f32 to vector<1x128xf32>
    %446 = arith.mulf %445, %444 : vector<1x128xf32>
    %447 = arith.addf %442, %446 : vector<1x128xf32>
    %c44 = arith.constant 44 : index
    %448 = memref.load %arg1[%c44] : memref<48xf32, #tpu.memory_space<smem>>
    %449 = vector.extract_strided_slice %409 {offsets = [2, 0], sizes = [1, 128], strides = [1, 1]} : vector<6x128xf32> to vector<1x128xf32>
    %450 = vector.broadcast %448 : f32 to vector<1x128xf32>
    %451 = arith.mulf %450, %449 : vector<1x128xf32>
    %452 = arith.addf %447, %451 : vector<1x128xf32>
    %c45 = arith.constant 45 : index
    %453 = memref.load %arg1[%c45] : memref<48xf32, #tpu.memory_space<smem>>
    %454 = vector.extract_strided_slice %409 {offsets = [3, 0], sizes = [1, 128], strides = [1, 1]} : vector<6x128xf32> to vector<1x128xf32>
    %455 = vector.broadcast %453 : f32 to vector<1x128xf32>
    %456 = arith.mulf %455, %454 : vector<1x128xf32>
    %457 = arith.addf %452, %456 : vector<1x128xf32>
    %c46 = arith.constant 46 : index
    %458 = memref.load %arg1[%c46] : memref<48xf32, #tpu.memory_space<smem>>
    %459 = vector.extract_strided_slice %409 {offsets = [4, 0], sizes = [1, 128], strides = [1, 1]} : vector<6x128xf32> to vector<1x128xf32>
    %460 = vector.broadcast %458 : f32 to vector<1x128xf32>
    %461 = arith.mulf %460, %459 : vector<1x128xf32>
    %462 = arith.addf %457, %461 : vector<1x128xf32>
    %c47 = arith.constant 47 : index
    %463 = memref.load %arg1[%c47] : memref<48xf32, #tpu.memory_space<smem>>
    %464 = vector.extract_strided_slice %409 {offsets = [5, 0], sizes = [1, 128], strides = [1, 1]} : vector<6x128xf32> to vector<1x128xf32>
    %465 = vector.broadcast %463 : f32 to vector<1x128xf32>
    %466 = arith.mulf %465, %464 : vector<1x128xf32>
    %467 = arith.addf %462, %466 : vector<1x128xf32>
    %c18_92 = arith.constant 18 : index
    %468 = memref.load %arg2[%c18_92] : memref<24xf32, #tpu.memory_space<smem>>
    %c36_93 = arith.constant 36 : index
    %469 = memref.load %arg1[%c36_93] : memref<48xf32, #tpu.memory_space<smem>>
    %470 = vector.broadcast %469 : f32 to vector<1x128xf32>
    %471 = arith.mulf %470, %438 : vector<1x128xf32>
    %472 = vector.broadcast %468 : f32 to vector<1x128xf32>
    %473 = arith.addf %472, %471 : vector<1x128xf32>
    %c42_94 = arith.constant 42 : index
    %474 = memref.load %arg1[%c42_94] : memref<48xf32, #tpu.memory_space<smem>>
    %475 = vector.broadcast %474 : f32 to vector<1x128xf32>
    %476 = arith.mulf %475, %467 : vector<1x128xf32>
    %477 = arith.addf %473, %476 : vector<1x128xf32>
    %cst_95 = arith.constant 0.000000e+00 : f32
    %478 = vector.broadcast %cst_95 : f32 to vector<1x128xf32>
    %479 = arith.maximumf %477, %478 : vector<1x128xf32>
    %c19_96 = arith.constant 19 : index
    %480 = memref.load %arg2[%c19_96] : memref<24xf32, #tpu.memory_space<smem>>
    %c37_97 = arith.constant 37 : index
    %481 = memref.load %arg1[%c37_97] : memref<48xf32, #tpu.memory_space<smem>>
    %482 = vector.broadcast %481 : f32 to vector<1x128xf32>
    %483 = arith.mulf %482, %438 : vector<1x128xf32>
    %484 = vector.broadcast %480 : f32 to vector<1x128xf32>
    %485 = arith.addf %484, %483 : vector<1x128xf32>
    %c43_98 = arith.constant 43 : index
    %486 = memref.load %arg1[%c43_98] : memref<48xf32, #tpu.memory_space<smem>>
    %487 = vector.broadcast %486 : f32 to vector<1x128xf32>
    %488 = arith.mulf %487, %467 : vector<1x128xf32>
    %489 = arith.addf %485, %488 : vector<1x128xf32>
    %cst_99 = arith.constant 0.000000e+00 : f32
    %490 = vector.broadcast %cst_99 : f32 to vector<1x128xf32>
    %491 = arith.maximumf %489, %490 : vector<1x128xf32>
    %c20_100 = arith.constant 20 : index
    %492 = memref.load %arg2[%c20_100] : memref<24xf32, #tpu.memory_space<smem>>
    %c38_101 = arith.constant 38 : index
    %493 = memref.load %arg1[%c38_101] : memref<48xf32, #tpu.memory_space<smem>>
    %494 = vector.broadcast %493 : f32 to vector<1x128xf32>
    %495 = arith.mulf %494, %438 : vector<1x128xf32>
    %496 = vector.broadcast %492 : f32 to vector<1x128xf32>
    %497 = arith.addf %496, %495 : vector<1x128xf32>
    %c44_102 = arith.constant 44 : index
    %498 = memref.load %arg1[%c44_102] : memref<48xf32, #tpu.memory_space<smem>>
    %499 = vector.broadcast %498 : f32 to vector<1x128xf32>
    %500 = arith.mulf %499, %467 : vector<1x128xf32>
    %501 = arith.addf %497, %500 : vector<1x128xf32>
    %cst_103 = arith.constant 0.000000e+00 : f32
    %502 = vector.broadcast %cst_103 : f32 to vector<1x128xf32>
    %503 = arith.maximumf %501, %502 : vector<1x128xf32>
    %c21_104 = arith.constant 21 : index
    %504 = memref.load %arg2[%c21_104] : memref<24xf32, #tpu.memory_space<smem>>
    %c39_105 = arith.constant 39 : index
    %505 = memref.load %arg1[%c39_105] : memref<48xf32, #tpu.memory_space<smem>>
    %506 = vector.broadcast %505 : f32 to vector<1x128xf32>
    %507 = arith.mulf %506, %438 : vector<1x128xf32>
    %508 = vector.broadcast %504 : f32 to vector<1x128xf32>
    %509 = arith.addf %508, %507 : vector<1x128xf32>
    %c45_106 = arith.constant 45 : index
    %510 = memref.load %arg1[%c45_106] : memref<48xf32, #tpu.memory_space<smem>>
    %511 = vector.broadcast %510 : f32 to vector<1x128xf32>
    %512 = arith.mulf %511, %467 : vector<1x128xf32>
    %513 = arith.addf %509, %512 : vector<1x128xf32>
    %cst_107 = arith.constant 0.000000e+00 : f32
    %514 = vector.broadcast %cst_107 : f32 to vector<1x128xf32>
    %515 = arith.maximumf %513, %514 : vector<1x128xf32>
    %c22_108 = arith.constant 22 : index
    %516 = memref.load %arg2[%c22_108] : memref<24xf32, #tpu.memory_space<smem>>
    %c40_109 = arith.constant 40 : index
    %517 = memref.load %arg1[%c40_109] : memref<48xf32, #tpu.memory_space<smem>>
    %518 = vector.broadcast %517 : f32 to vector<1x128xf32>
    %519 = arith.mulf %518, %438 : vector<1x128xf32>
    %520 = vector.broadcast %516 : f32 to vector<1x128xf32>
    %521 = arith.addf %520, %519 : vector<1x128xf32>
    %c46_110 = arith.constant 46 : index
    %522 = memref.load %arg1[%c46_110] : memref<48xf32, #tpu.memory_space<smem>>
    %523 = vector.broadcast %522 : f32 to vector<1x128xf32>
    %524 = arith.mulf %523, %467 : vector<1x128xf32>
    %525 = arith.addf %521, %524 : vector<1x128xf32>
    %cst_111 = arith.constant 0.000000e+00 : f32
    %526 = vector.broadcast %cst_111 : f32 to vector<1x128xf32>
    %527 = arith.maximumf %525, %526 : vector<1x128xf32>
    %c23_112 = arith.constant 23 : index
    %528 = memref.load %arg2[%c23_112] : memref<24xf32, #tpu.memory_space<smem>>
    %c41_113 = arith.constant 41 : index
    %529 = memref.load %arg1[%c41_113] : memref<48xf32, #tpu.memory_space<smem>>
    %530 = vector.broadcast %529 : f32 to vector<1x128xf32>
    %531 = arith.mulf %530, %438 : vector<1x128xf32>
    %532 = vector.broadcast %528 : f32 to vector<1x128xf32>
    %533 = arith.addf %532, %531 : vector<1x128xf32>
    %c47_114 = arith.constant 47 : index
    %534 = memref.load %arg1[%c47_114] : memref<48xf32, #tpu.memory_space<smem>>
    %535 = vector.broadcast %534 : f32 to vector<1x128xf32>
    %536 = arith.mulf %535, %467 : vector<1x128xf32>
    %537 = arith.addf %533, %536 : vector<1x128xf32>
    %cst_115 = arith.constant 0.000000e+00 : f32
    %538 = vector.broadcast %cst_115 : f32 to vector<1x128xf32>
    %539 = arith.maximumf %537, %538 : vector<1x128xf32>
    %540 = tpu.concatenate %479, %491, %503, %515, %527, %539 in 0 : vector<1x128xf32>, vector<1x128xf32>, vector<1x128xf32>, vector<1x128xf32>, vector<1x128xf32>, vector<1x128xf32> -> vector<6x128xf32>
    %c3_116 = arith.constant 3 : index
    %c0_117 = arith.constant 0 : index
    %c0_118 = arith.constant 0 : index
    %541 = vector.load %arg4[%c3_116, %c0_117, %c0_118] : memref<4x6x128xf32, #tpu.memory_space<vmem>>, vector<1x6x128xf32>
    %542 = vector.shape_cast %541 : vector<1x6x128xf32> to vector<6x128xf32>
    %543 = vector.shape_cast %540 : vector<6x128xf32> to vector<1x6x128xf32>
    tpu.vector_store %arg4[%c3_116, %c0_117, %c0_118], %543 {strides = array<i32>} : memref<4x6x128xf32, #tpu.memory_space<vmem>>, vector<1x6x128xf32>,
    return
  }
  func.func @transform_0(%arg0: i32) -> i32 {
    %c0_i32 = arith.constant 0 : i32
    %c0_i32_0 = arith.constant 0 : i32
    return %c0_i32 : i32
  }
  func.func @transform_1(%arg0: i32) -> i32 {
    %c0_i32 = arith.constant 0 : i32
    %c0_i32_0 = arith.constant 0 : i32
    return %c0_i32 : i32
  }
  func.func @transform_2(%arg0: i32) -> (i32, i32, i32) {
    %c0_i32 = arith.constant 0 : i32
    %c0_i32_0 = arith.constant 0 : i32
    %c0_i32_1 = arith.constant 0 : i32
    return %c0_i32, %c0_i32_0, %arg0 : i32, i32, i32
  }
  func.func @transform_3(%arg0: i32) -> (i32, i32, i32) {
    %c0_i32 = arith.constant 0 : i32
    %c0_i32_0 = arith.constant 0 : i32
    %c0_i32_1 = arith.constant 0 : i32
    return %c0_i32, %c0_i32_0, %arg0 : i32, i32, i32
  }
}

</mosaic_0001>

<llo_original>
// kernel: tpu_custom_call.1
$region0: #{tpu_custom_call.1}
  #allocation0 [shape = 'u32[]', space=smem, size = 0x4, offset = 0x4, fixed_abs, tag = 'smem constant byte address 0x4 - core index']
  #allocation1 [shape = 'u32[72,128]{1,0:T(1,128)}', space=vmem, size = 0x9000, scoped, tag = 'internal scratch']
  %s0 = inlined_call_operand.vmem [shape: f32[48], index: 0, kind: input, shape index: {}]
  %s1 = inlined_call_operand.vmem [shape: f32[24], index: 1, kind: input, shape index: {}]
  %s2 = inlined_call_operand.vmem [shape: f32[4,6,256], index: 2, kind: input, shape index: {}]
  %s3 = inlined_call_operand.vmem [shape: f32[4,6,256], index: 3, kind: output, shape index: {}]
  %s4 = sld [smem:[#allocation0]]
  $region125: #{tpu_custom_call.1} parent=0
    _
  %s6 = ssub.s32 1, %s4
  %s7 = scalar_select 0, %s6, %s4
  $region1: #{tpu_custom_call.1} parent=0
    #allocation2 [shape = 'u8[512]{0}', space=smem, size = 0x200, scoped, tag = 'input window, operand 0, single buffered']
    #allocation3 [shape = 's32[2]{0}', space=sflag, size = 0x8, scoped, tag = 'scoped memory for tpu_custom_call.1']
    #allocation4 [shape = 'u8[512]{0}', space=smem, size = 0x200, scoped, tag = 'input window, operand 1, single buffered']
    #allocation5 [shape = 's32[1]{0}', space=sflag, size = 0x4, scoped, tag = 'scoped memory for tpu_custom_call.1']
    #allocation6 [shape = 'u8[32768]{0}', space=vmem, size = 0x8000, scoped, tag = 'input window, operand 2']
    #allocation7 [shape = 'u8[32768]{0}', space=vmem, size = 0x8000, scoped, tag = 'output window, operand 0']
    %8 = vsyncpa [#allocation3], 0
    %9 = vsyncpa [#allocation5], 0
    loop: start=0, step=1, limit=4
    $region2: #{tpu_custom_call.1} parent=1 // loop_pre_header
      _
    $region3: #{tpu_custom_call.1} parent=1 // loop_header
      %s11 = sphi 0, %s15
      %p12 = scmp.ge.s32.totalorder %s11, 4
      %s19 = sphi 0, %s19
      %s21 = sphi 0, %s19
      %s22 = sphi 0, %s21
      %s36 = sphi 0, %s22
      %s40 = sphi 0, %s40
      %s42 = sphi 0, %s40
      %s43 = sphi 0, %s42
      %s57 = sphi 0, %s43
      %s63 = sphi 0, %s65
      %s66 = sphi 0, %s63
      %s67 = sphi 0, %s66
      %s83 = sphi 0, %s67
      %s89 = sphi 0, %s91
      %s92 = sphi 0, %s89
      %s93 = sphi 0, %s92
      %s109 = sphi 0, %s93
    $region4: #{tpu_custom_call.1} parent=1 // loop_header_branch
      %14 = sbr.rel (%p12) target = $region8
    $region5: #{tpu_custom_call.1} parent=1 // loop_body
      %s16 = ssub.s32 %s11, 1
      %s17 = ssub.s32 %s11, 2
      %s18 = sadd.s32 %s11, 1
      %s20 = sadd.s32 %s19, 1
      %p23 = scmp.eq.s32.totalorder %s11, 1
      %p24 = scmp.ne.s32.totalorder %s19, %s21
      %p25 = scmp.eq.s32.totalorder %s11, 0
      %p26 = por %p24, %p25
      %p27 = scmp.ne.s32.totalorder %s19, %s21
      %p28 = scmp.eq.s32.totalorder %s16, 1
      %p29 = por %p27, %p28
      %p30 = scmp.ne.s32.totalorder %s21, %s22
      %p31 = scmp.eq.s32.totalorder %s16, 0
      %p32 = por %p30, %p31
      %p33 = scmp.ne.s32.totalorder %s21, %s22
      %p34 = scmp.eq.s32.totalorder %s17, 1
      %p35 = por %p33, %p34
      %p37 = scmp.ne.s32.totalorder %s22, %s36
      %p38 = scmp.eq.s32.totalorder %s17, 0
      %p39 = por %p37, %p38
      %s41 = sadd.s32 %s40, 1
      %p44 = scmp.eq.s32.totalorder %s11, 1
      %p45 = scmp.ne.s32.totalorder %s40, %s42
      %p46 = scmp.eq.s32.totalorder %s11, 0
      %p47 = por %p45, %p46
      %p48 = scmp.ne.s32.totalorder %s40, %s42
      %p49 = scmp.eq.s32.totalorder %s16, 1
      %p50 = por %p48, %p49
      %p51 = scmp.ne.s32.totalorder %s42, %s43
      %p52 = scmp.eq.s32.totalorder %s16, 0
      %p53 = por %p51, %p52
      %p54 = scmp.ne.s32.totalorder %s42, %s43
      %p55 = scmp.eq.s32.totalorder %s17, 1
      %p56 = por %p54, %p55
      %p58 = scmp.ne.s32.totalorder %s43, %s57
      %p59 = scmp.eq.s32.totalorder %s17, 0
      %p60 = por %p58, %p59
      %s61 = ssub.s32 %s11, %s18
      %p62 = scmp.eq.s32.totalorder %s61, 0
      %s64 = sadd.s32 %s63, 1
      %s65 = scalar_select %p62, %s63, %s64
      %p68 = pneg %p62
      %p69 = scmp.eq.s32.totalorder %s11, 1
      %p70 = por %p68, %p69
      %p71 = scmp.ne.s32.totalorder %s63, %s66
      %p72 = scmp.eq.s32.totalorder %s11, 0
      %p73 = por %p71, %p72
      %p74 = scmp.ne.s32.totalorder %s63, %s66
      %p75 = scmp.eq.s32.totalorder %s16, 1
      %p76 = por %p74, %p75
      %p77 = scmp.ne.s32.totalorder %s66, %s67
      %p78 = scmp.eq.s32.totalorder %s16, 0
      %p79 = por %p77, %p78
      %p80 = scmp.ne.s32.totalorder %s66, %s67
      %p81 = scmp.eq.s32.totalorder %s17, 1
      %p82 = por %p80, %p81
      %p84 = scmp.ne.s32.totalorder %s67, %s83
      %p85 = scmp.eq.s32.totalorder %s17, 0
      %p86 = por %p84, %p85
      %s87 = ssub.s32 %s11, %s18
      %p88 = scmp.eq.s32.totalorder %s87, 0
      %s90 = sadd.s32 %s89, 1
      %s91 = scalar_select %p88, %s89, %s90
      %p94 = pneg %p88
      %p95 = scmp.eq.s32.totalorder %s11, 1
      %p96 = por %p94, %p95
      %p97 = scmp.ne.s32.totalorder %s89, %s92
      %p98 = scmp.eq.s32.totalorder %s11, 0
      %p99 = por %p97, %p98
      %p100 = scmp.ne.s32.totalorder %s89, %s92
      %p101 = scmp.eq.s32.totalorder %s16, 1
      %p102 = por %p100, %p101
      %p103 = scmp.ne.s32.totalorder %s92, %s93
      %p104 = scmp.eq.s32.totalorder %s16, 0
      %p105 = por %p103, %p104
      %p106 = scmp.ne.s32.totalorder %s92, %s93
      %p107 = scmp.eq.s32.totalorder %s17, 1
      %p108 = por %p106, %p107
      %p110 = scmp.ne.s32.totalorder %s93, %s109
      %p111 = scmp.eq.s32.totalorder %s17, 0
      %p112 = por %p110, %p111
      %p113 = scmp.le.s32.totalorder 1, %s11
      %p114 = scmp.lt.s32.totalorder %s11, 3
      %p115 = pnand %p113, %p114
      %p116 = pneg %p115
      // Predicated region
      $region9: #{tpu_custom_call.1} parent=5 // pred_check
        _
      $region10: #{tpu_custom_call.1} parent=5 // pred_check_branch
        %118 = sbr.rel (%p115) target = $region12
      $region11: #{tpu_custom_call.1} parent=5 // pred_region
        %s119 = ssub.s32 %s11, 1
        // Predicated region
        $region13: #{tpu_custom_call.1} parent=11 // pred_check
          %p120 = pneg %p32
        $region14: #{tpu_custom_call.1} parent=11 // pred_check_branch
          %122 = sbr.rel (%p120) target = $region16
        $region15: #{tpu_custom_call.1} parent=11 // pred_region
          %124 = vsyncadd [#allocation3], 0
          %s126 = sshll.u32 %s0, 4
          %s127 = int_to_ptr.vmem [resolvable:$true] %s126
          %129 = dma.vmem_to_smem %s127, 16, [#allocation2], [#allocation3]
        $region16: #{tpu_custom_call.1} parent=11 // pred_fallthru
          _
        // Predicated region
        $region17: #{tpu_custom_call.1} parent=11 // pred_check
          %p130 = pneg %p53
        $region18: #{tpu_custom_call.1} parent=11 // pred_check_branch
          %132 = sbr.rel (%p130) target = $region20
        $region19: #{tpu_custom_call.1} parent=11 // pred_region
          %134 = vsyncadd [#allocation5], 0
          %s136 = sshll.u32 %s1, 4
          %s137 = int_to_ptr.vmem [resolvable:$true] %s136
          %139 = dma.vmem_to_smem %s137, 16, [#allocation4], [#allocation5]
        $region20: #{tpu_custom_call.1} parent=11 // pred_fallthru
          _
      $region12: #{tpu_custom_call.1} parent=5 // pred_fallthru
        _
      %p140 = scmp.lt.s32.totalorder %s11, 2
      // Predicated region
      $region21: #{tpu_custom_call.1} parent=5 // pred_check
        %p141 = pneg %p140
      $region22: #{tpu_custom_call.1} parent=5 // pred_check_branch
        %143 = sbr.rel (%p141) target = $region24
      $region23: #{tpu_custom_call.1} parent=5 // pred_region
        // Predicated region
        $region25: #{tpu_custom_call.1} parent=23 // pred_check
          %p144 = pneg %p73
        $region26: #{tpu_custom_call.1} parent=23 // pred_check_branch
          %146 = sbr.rel (%p144) target = $region28
        $region27: #{tpu_custom_call.1} parent=23 // pred_region
          %s147 = sand.u32 %s63, 1
          %s148 = sand.u32 %s63, 1
          %s149 = smul.addr %s148, 32
          %s150 = scalar_lea.vmem [#allocation6], %s149
          %s151 = smul.addr %s11, 8
          %s152 = scalar_lea.vmem %s2, %s151
          // Predicated region
          $region29: #{tpu_custom_call.1} parent=27 // pred_check
            _
          $region30: #{tpu_custom_call.1} parent=27 // pred_check_branch
            %154 = sbr.rel (0) target = $region32
          $region31: #{tpu_custom_call.1} parent=27 // pred_region
            // Predicated region
            $region33: #{tpu_custom_call.1} parent=31 // pred_check
              _
            $region34: #{tpu_custom_call.1} parent=31 // pred_check_branch
              %156 = sbr.rel (0) target = $region36
            $region35: #{tpu_custom_call.1} parent=31 // pred_region
              // Predicated region
              $region48: #{tpu_custom_call.1} parent=35 // pred_check
                _
              $region49: #{tpu_custom_call.1} parent=35 // pred_check_branch
                %178 = sbr.rel (0) target = $region51
              $region50: #{tpu_custom_call.1} parent=35 // pred_region
                loop: start=0, step=1, limit=1
                $region52: #{tpu_custom_call.1} parent=50 // loop_pre_header
                  _
                $region53: #{tpu_custom_call.1} parent=50 // loop_header
                  %s180 = sphi 0, %s184
                  %p181 = scmp.ge.s32.totalorder %s180, 1
                  %s185 = sphi %s152, %s152
                  %s186 = sphi %s150, %s150
                $region54: #{tpu_custom_call.1} parent=50 // loop_header_branch
                  %183 = sbr.rel (%p181) target = $region58
                $region55: #{tpu_custom_call.1} parent=50 // loop_body
                  %v187 = vld [vmem:[%s185] sm:$0xff]
                  %188 = vst [vmem:[%s186] sm:$0xff] %v187
                  %v189 = vld [vmem:[%s185 + $0x10] sm:$0xff]
                  %190 = vst [vmem:[%s186 + $0x8] sm:$0xff] %v189
                  %v191 = vld [vmem:[%s185 + $0x20] sm:$0xff]
                  %192 = vst [vmem:[%s186 + $0x10] sm:$0xff] %v191
                  %v193 = vld [vmem:[%s185 + $0x30] sm:$0xff]
                  %194 = vst [vmem:[%s186 + $0x18] sm:$0xff] %v193
                $region56: #{tpu_custom_call.1} parent=50 // loop_footer
                  %s184 = sadd.s32 1, %s180
                $region57: #{tpu_custom_call.1} parent=50 // loop_footer_branch
                  %179 = sbr.rel target = $region53
                $region58: #{tpu_custom_call.1} parent=50 // loop_exit
                  _
              $region51: #{tpu_custom_call.1} parent=35 // pred_fallthru
                _
              // Predicated region
              $region59: #{tpu_custom_call.1} parent=35 // pred_check
                _
              $region60: #{tpu_custom_call.1} parent=35 // pred_check_branch
                %196 = sbr.rel target = $region62
              $region61: #{tpu_custom_call.1} parent=35 // pred_region
                _
              $region62: #{tpu_custom_call.1} parent=35 // pred_fallthru
                _
            $region36: #{tpu_custom_call.1} parent=31 // pred_fallthru
              _
            // Predicated region
            $region37: #{tpu_custom_call.1} parent=31 // pred_check
              _
            $region38: #{tpu_custom_call.1} parent=31 // pred_check_branch
              %158 = sbr.rel target = $region40
            $region39: #{tpu_custom_call.1} parent=31 // pred_region
              %s160 = ssub.s32 256, 1
              loop: start=0, step=1, limit=1
              $region41: #{tpu_custom_call.1} parent=39 // loop_pre_header
                _
              $region42: #{tpu_custom_call.1} parent=39 // loop_header
                %s162 = sphi 0, %s166
                %p163 = scmp.ge.s32.totalorder %s162, 1
                %s167 = sphi %s152, %s152
                %s168 = sphi %s150, %s150
              $region43: #{tpu_custom_call.1} parent=39 // loop_header_branch
                %165 = sbr.rel (%p163) target = $region47
              $region44: #{tpu_custom_call.1} parent=39 // loop_body
                %v169 = vld [vmem:[%s167] sm:%s160]
                %170 = vst [vmem:[%s168] sm:%s160] %v169
                %v171 = vld [vmem:[%s167 + $0x10] sm:%s160]
                %172 = vst [vmem:[%s168 + $0x8] sm:%s160] %v171
                %v173 = vld [vmem:[%s167 + $0x20] sm:%s160]
                %174 = vst [vmem:[%s168 + $0x10] sm:%s160] %v173
                %v175 = vld [vmem:[%s167 + $0x30] sm:%s160]
                %176 = vst [vmem:[%s168 + $0x18] sm:%s160] %v175
              $region45: #{tpu_custom_call.1} parent=39 // loop_footer
                %s166 = sadd.s32 1, %s162
              $region46: #{tpu_custom_call.1} parent=39 // loop_footer_branch
                %161 = sbr.rel target = $region42
              $region47: #{tpu_custom_call.1} parent=39 // loop_exit
                _
            $region40: #{tpu_custom_call.1} parent=31 // pred_fallthru
              _
          $region32: #{tpu_custom_call.1} parent=27 // pred_fallthru
            _
          %197 = vnop
        $region28: #{tpu_custom_call.1} parent=23 // pred_fallthru
          _
      $region24: #{tpu_custom_call.1} parent=5 // pred_fallthru
        _
      %p198 = scmp.le.s32.totalorder 1, %s11
      %p199 = scmp.lt.s32.totalorder %s11, 3
      %p200 = pnand %p198, %p199
      %p201 = pneg %p200
      // Predicated region
      $region63: #{tpu_custom_call.1} parent=5 // pred_check
        _
      $region64: #{tpu_custom_call.1} parent=5 // pred_check_branch
        %203 = sbr.rel (%p200) target = $region66
      $region65: #{tpu_custom_call.1} parent=5 // pred_region
        %s204 = ssub.s32 %s11, 1
        // Predicated region
        $region67: #{tpu_custom_call.1} parent=65 // pred_check
          %p205 = pneg %p32
        $region68: #{tpu_custom_call.1} parent=65 // pred_check_branch
          %207 = sbr.rel (%p205) target = $region70
        $region69: #{tpu_custom_call.1} parent=65 // pred_region
          %209 = dma.done [#allocation3], 16
        $region70: #{tpu_custom_call.1} parent=65 // pred_fallthru
          _
        // Predicated region
        $region71: #{tpu_custom_call.1} parent=65 // pred_check
          %p210 = pneg %p53
        $region72: #{tpu_custom_call.1} parent=65 // pred_check_branch
          %212 = sbr.rel (%p210) target = $region74
        $region73: #{tpu_custom_call.1} parent=65 // pred_region
          %214 = dma.done [#allocation5], 16
        $region74: #{tpu_custom_call.1} parent=65 // pred_fallthru
          _
        %s215 = sand.u32 %s66, 1
        %s216 = sand.u32 %s66, 1
        %s217 = smul.addr %s216, 32
        %s218 = scalar_lea.vmem [#allocation6], %s217
        // Predicated region
        $region75: #{tpu_custom_call.1} parent=65 // pred_check
          %p219 = pneg %p79
        $region76: #{tpu_custom_call.1} parent=65 // pred_check_branch
          %221 = sbr.rel (%p219) target = $region78
        $region77: #{tpu_custom_call.1} parent=65 // pred_region
          _
        $region78: #{tpu_custom_call.1} parent=65 // pred_fallthru
          _
        %222 = sfence
        %p223 = pneg %p32
        %p224 = pneg %p29
        %p225 = pneg %p53
        %p226 = pneg %p50
        %s227 = sand.u32 %s66, 1
        %s228 = sand.u32 %s66, 1
        %s229 = smul.addr %s228, 32
        %s230 = scalar_lea.vmem [#allocation6], %s229
        %p231 = pneg %p79
        %p232 = pneg %p76
        %p233 = pneg %p105
        %p234 = pneg %p102
        %s235 = sand.u32 %s92, 1
        %s236 = sand.u32 %s92, 1
        %s237 = smul.addr %s236, 32
        %s238 = scalar_lea.vmem [#allocation7], %s237
        %v239 = vld [vmem:[%s218] sm:$0x3f]
        %s240 = sld [smem:[#allocation2]]
        %v241 = vstv %s240
        %v242 = vmul.f32 %v241, %v239
        %s243 = sld [smem:[#allocation2 + $0x1]]
        %v244 = vstv %s243
        %v245 = vmul.f32 %v244, %v239
        %v247 = vrot.slane %v245, 1
        %v249 = vadd.f32 %v242, %v247
        %s250 = sld [smem:[#allocation2 + $0x2]]
        %v251 = vstv %s250
        %v252 = vmul.f32 %v251, %v239
        %v254 = vrot.slane %v252, 2
        %v256 = vadd.f32 %v249, %v254
        %s257 = sld [smem:[#allocation2 + $0x3]]
        %v258 = vstv %s257
        %v259 = vmul.f32 %v258, %v239
        %v261 = vrot.slane %v259, 3
        %v263 = vadd.f32 %v256, %v261
        %s264 = sld [smem:[#allocation2 + $0x4]]
        %v265 = vstv %s264
        %v266 = vmul.f32 %v265, %v239
        %v268 = vrot.slane %v266, 4
        %v270 = vadd.f32 %v263, %v268
        %s271 = sld [smem:[#allocation2 + $0x5]]
        %v272 = vstv %s271
        %v273 = vmul.f32 %v272, %v239
        %v275 = vrot.slane %v273, 5
        %v277 = vadd.f32 %v270, %v275
        %s278 = sld [smem:[#allocation2 + $0x6]]
        %v279 = vstv %s278
        %v280 = vmul.f32 %v279, %v239
        %s281 = sld [smem:[#allocation2 + $0x7]]
        %v282 = vstv %s281
        %v283 = vmul.f32 %v282, %v239
        %v285 = vrot.slane %v283, 1
        %v287 = vadd.f32 %v280, %v285
        %s288 = sld [smem:[#allocation2 + $0x8]]
        %v289 = vstv %s288
        %v290 = vmul.f32 %v289, %v239
        %v292 = vrot.slane %v290, 2
        %v294 = vadd.f32 %v287, %v292
        %s295 = sld [smem:[#allocation2 + $0x9]]
        %v296 = vstv %s295
        %v297 = vmul.f32 %v296, %v239
        %v299 = vrot.slane %v297, 3
        %v301 = vadd.f32 %v294, %v299
        %s302 = sld [smem:[#allocation2 + $0xa]]
        %v303 = vstv %s302
        %v304 = vmul.f32 %v303, %v239
        %v306 = vrot.slane %v304, 4
        %v308 = vadd.f32 %v301, %v306
        %s309 = sld [smem:[#allocation2 + $0xb]]
        %v310 = vstv %s309
        %v311 = vmul.f32 %v310, %v239
        %v313 = vrot.slane %v311, 5
        %v315 = vadd.f32 %v308, %v313
        %s316 = sld [smem:[#allocation4]]
        %v317 = vmul.f32 %v241, %v277
        %v318 = vstv %s316
        %v319 = vadd.f32 %v318, %v317
        %v320 = vmul.f32 %v279, %v315
        %v321 = vadd.f32 %v319, %v320
        %v322 = vmax.f32 %v321, 0.0
        %s323 = sld [smem:[#allocation4 + $0x1]]
        %v324 = vmul.f32 %v244, %v277
        %v325 = vstv %s323
        %v326 = vadd.f32 %v325, %v324
        %v327 = vmul.f32 %v282, %v315
        %v328 = vadd.f32 %v326, %v327
        %v329 = vmax.f32 %v328, 0.0
        %s330 = sld [smem:[#allocation4 + $0x2]]
        %v331 = vmul.f32 %v251, %v277
        %v332 = vstv %s330
        %v333 = vadd.f32 %v332, %v331
        %v334 = vmul.f32 %v289, %v315
        %v335 = vadd.f32 %v333, %v334
        %v336 = vmax.f32 %v335, 0.0
        %s337 = sld [smem:[#allocation4 + $0x3]]
        %v338 = vmul.f32 %v258, %v277
        %v339 = vstv %s337
        %v340 = vadd.f32 %v339, %v338
        %v341 = vmul.f32 %v296, %v315
        %v342 = vadd.f32 %v340, %v341
        %v343 = vmax.f32 %v342, 0.0
        %s344 = sld [smem:[#allocation4 + $0x4]]
        %v345 = vmul.f32 %v265, %v277
        %v346 = vstv %s344
        %v347 = vadd.f32 %v346, %v345
        %v348 = vmul.f32 %v303, %v315
        %v349 = vadd.f32 %v347, %v348
        %v350 = vmax.f32 %v349, 0.0
        %s351 = sld [smem:[#allocation4 + $0x5]]
        %v352 = vmul.f32 %v272, %v277
        %v353 = vstv %s351
        %v354 = vadd.f32 %v353, %v352
        %v355 = vmul.f32 %v310, %v315
        %v356 = vadd.f32 %v354, %v355
        %v357 = vmax.f32 %v356, 0.0
        %v359 = vrot.slane %v329, 7
        %v362 = vrot.slane %v336, 6
        %v365 = vrot.slane %v343, 5
        %v368 = vrot.slane %v350, 4
        %v371 = vrot.slane %v357, 3
        %vm373 = vcmask 1040384
        %v374 = vsel %vm373, %v322, %v359
        %vm375 = vcmask 1041408
        %v376 = vsel %vm375, %v374, %v362
        %vm377 = vcmask 1042432
        %v378 = vsel %vm377, %v376, %v365
        %vm379 = vcmask 1043456
        %v380 = vsel %vm379, %v378, %v368
        %vm381 = vcmask 1044480
        %v382 = vsel %vm381, %v380, %v371
        %383 = vst [vmem:[%s238] sm:$0x3f] %v382
        %s384 = scalar_lea.vmem %s218, 8 [#allocation6]
        %v385 = vld [vmem:[%s384] sm:$0x3f]
        %s386 = sld [smem:[#allocation2 + $0xc]]
        %v387 = vstv %s386
        %v388 = vmul.f32 %v387, %v385
        %s389 = sld [smem:[#allocation2 + $0xd]]
        %v390 = vstv %s389
        %v391 = vmul.f32 %v390, %v385
        %v393 = vrot.slane %v391, 1
        %v395 = vadd.f32 %v388, %v393
        %s396 = sld [smem:[#allocation2 + $0xe]]
        %v397 = vstv %s396
        %v398 = vmul.f32 %v397, %v385
        %v400 = vrot.slane %v398, 2
        %v402 = vadd.f32 %v395, %v400
        %s403 = sld [smem:[#allocation2 + $0xf]]
        %v404 = vstv %s403
        %v405 = vmul.f32 %v404, %v385
        %v407 = vrot.slane %v405, 3
        %v409 = vadd.f32 %v402, %v407
        %s410 = sld [smem:[#allocation2 + $0x10]]
        %v411 = vstv %s410
        %v412 = vmul.f32 %v411, %v385
        %v414 = vrot.slane %v412, 4
        %v416 = vadd.f32 %v409, %v414
        %s417 = sld [smem:[#allocation2 + $0x11]]
        %v418 = vstv %s417
        %v419 = vmul.f32 %v418, %v385
        %v421 = vrot.slane %v419, 5
        %v423 = vadd.f32 %v416, %v421
        %s424 = sld [smem:[#allocation2 + $0x12]]
        %v425 = vstv %s424
        %v426 = vmul.f32 %v425, %v385
        %s427 = sld [smem:[#allocation2 + $0x13]]
        %v428 = vstv %s427
        %v429 = vmul.f32 %v428, %v385
        %v431 = vrot.slane %v429, 1
        %v433 = vadd.f32 %v426, %v431
        %s434 = sld [smem:[#allocation2 + $0x14]]
        %v435 = vstv %s434
        %v436 = vmul.f32 %v435, %v385
        %v438 = vrot.slane %v436, 2
        %v440 = vadd.f32 %v433, %v438
        %s441 = sld [smem:[#allocation2 + $0x15]]
        %v442 = vstv %s441
        %v443 = vmul.f32 %v442, %v385
        %v445 = vrot.slane %v443, 3
        %v447 = vadd.f32 %v440, %v445
        %s448 = sld [smem:[#allocation2 + $0x16]]
        %v449 = vstv %s448
        %v450 = vmul.f32 %v449, %v385
        %v452 = vrot.slane %v450, 4
        %v454 = vadd.f32 %v447, %v452
        %s455 = sld [smem:[#allocation2 + $0x17]]
        %v456 = vstv %s455
        %v457 = vmul.f32 %v456, %v385
        %v459 = vrot.slane %v457, 5
        %v461 = vadd.f32 %v454, %v459
        %s462 = sld [smem:[#allocation4 + $0x6]]
        %v463 = vmul.f32 %v387, %v423
        %v464 = vstv %s462
        %v465 = vadd.f32 %v464, %v463
        %v466 = vmul.f32 %v425, %v461
        %v467 = vadd.f32 %v465, %v466
        %v468 = vmax.f32 %v467, 0.0
        %s469 = sld [smem:[#allocation4 + $0x7]]
        %v470 = vmul.f32 %v390, %v423
        %v471 = vstv %s469
        %v472 = vadd.f32 %v471, %v470
        %v473 = vmul.f32 %v428, %v461
        %v474 = vadd.f32 %v472, %v473
        %v475 = vmax.f32 %v474, 0.0
        %s476 = sld [smem:[#allocation4 + $0x8]]
        %v477 = vmul.f32 %v397, %v423
        %v478 = vstv %s476
        %v479 = vadd.f32 %v478, %v477
        %v480 = vmul.f32 %v435, %v461
        %v481 = vadd.f32 %v479, %v480
        %v482 = vmax.f32 %v481, 0.0
        %s483 = sld [smem:[#allocation4 + $0x9]]
        %v484 = vmul.f32 %v404, %v423
        %v485 = vstv %s483
        %v486 = vadd.f32 %v485, %v484
        %v487 = vmul.f32 %v442, %v461
        %v488 = vadd.f32 %v486, %v487
        %v489 = vmax.f32 %v488, 0.0
        %s490 = sld [smem:[#allocation4 + $0xa]]
        %v491 = vmul.f32 %v411, %v423
        %v492 = vstv %s490
        %v493 = vadd.f32 %v492, %v491
        %v494 = vmul.f32 %v449, %v461
        %v495 = vadd.f32 %v493, %v494
        %v496 = vmax.f32 %v495, 0.0
        %s497 = sld [smem:[#allocation4 + $0xb]]
        %v498 = vmul.f32 %v418, %v423
        %v499 = vstv %s497
        %v500 = vadd.f32 %v499, %v498
        %v501 = vmul.f32 %v456, %v461
        %v502 = vadd.f32 %v500, %v501
        %v503 = vmax.f32 %v502, 0.0
        %v505 = vrot.slane %v475, 7
        %v508 = vrot.slane %v482, 6
        %v511 = vrot.slane %v489, 5
        %v514 = vrot.slane %v496, 4
        %v517 = vrot.slane %v503, 3
        %v519 = vsel %vm373, %v468, %v505
        %v520 = vsel %vm375, %v519, %v508
        %v521 = vsel %vm377, %v520, %v511
        %v522 = vsel %vm379, %v521, %v514
        %v523 = vsel %vm381, %v522, %v517
        %s524 = scalar_lea.vmem %s238, 8 [#allocation7]
        %525 = vst [vmem:[%s524] sm:$0x3f] %v523
        %s526 = scalar_lea.vmem %s218, 16 [#allocation6]
        %v527 = vld [vmem:[%s526] sm:$0x3f]
        %s528 = sld [smem:[#allocation2 + $0x18]]
        %v529 = vstv %s528
        %v530 = vmul.f32 %v529, %v527
        %s531 = sld [smem:[#allocation2 + $0x19]]
        %v532 = vstv %s531
        %v533 = vmul.f32 %v532, %v527
        %v535 = vrot.slane %v533, 1
        %v537 = vadd.f32 %v530, %v535
        %s538 = sld [smem:[#allocation2 + $0x1a]]
        %v539 = vstv %s538
        %v540 = vmul.f32 %v539, %v527
        %v542 = vrot.slane %v540, 2
        %v544 = vadd.f32 %v537, %v542
        %s545 = sld [smem:[#allocation2 + $0x1b]]
        %v546 = vstv %s545
        %v547 = vmul.f32 %v546, %v527
        %v549 = vrot.slane %v547, 3
        %v551 = vadd.f32 %v544, %v549
        %s552 = sld [smem:[#allocation2 + $0x1c]]
        %v553 = vstv %s552
        %v554 = vmul.f32 %v553, %v527
        %v556 = vrot.slane %v554, 4
        %v558 = vadd.f32 %v551, %v556
        %s559 = sld [smem:[#allocation2 + $0x1d]]
        %v560 = vstv %s559
        %v561 = vmul.f32 %v560, %v527
        %v563 = vrot.slane %v561, 5
        %v565 = vadd.f32 %v558, %v563
        %s566 = sld [smem:[#allocation2 + $0x1e]]
        %v567 = vstv %s566
        %v568 = vmul.f32 %v567, %v527
        %s569 = sld [smem:[#allocation2 + $0x1f]]
        %v570 = vstv %s569
        %v571 = vmul.f32 %v570, %v527
        %v573 = vrot.slane %v571, 1
        %v575 = vadd.f32 %v568, %v573
        %s576 = sld [smem:[#allocation2 + $0x20]]
        %v577 = vstv %s576
        %v578 = vmul.f32 %v577, %v527
        %v580 = vrot.slane %v578, 2
        %v582 = vadd.f32 %v575, %v580
        %s583 = sld [smem:[#allocation2 + $0x21]]
        %v584 = vstv %s583
        %v585 = vmul.f32 %v584, %v527
        %v587 = vrot.slane %v585, 3
        %v589 = vadd.f32 %v582, %v587
        %s590 = sld [smem:[#allocation2 + $0x22]]
        %v591 = vstv %s590
        %v592 = vmul.f32 %v591, %v527
        %v594 = vrot.slane %v592, 4
        %v596 = vadd.f32 %v589, %v594
        %s597 = sld [smem:[#allocation2 + $0x23]]
        %v598 = vstv %s597
        %v599 = vmul.f32 %v598, %v527
        %v601 = vrot.slane %v599, 5
        %v603 = vadd.f32 %v596, %v601
        %s604 = sld [smem:[#allocation4 + $0xc]]
        %v605 = vmul.f32 %v529, %v565
        %v606 = vstv %s604
        %v607 = vadd.f32 %v606, %v605
        %v608 = vmul.f32 %v567, %v603
        %v609 = vadd.f32 %v607, %v608
        %v610 = vmax.f32 %v609, 0.0
        %s611 = sld [smem:[#allocation4 + $0xd]]
        %v612 = vmul.f32 %v532, %v565
        %v613 = vstv %s611
        %v614 = vadd.f32 %v613, %v612
        %v615 = vmul.f32 %v570, %v603
        %v616 = vadd.f32 %v614, %v615
        %v617 = vmax.f32 %v616, 0.0
        %s618 = sld [smem:[#allocation4 + $0xe]]
        %v619 = vmul.f32 %v539, %v565
        %v620 = vstv %s618
        %v621 = vadd.f32 %v620, %v619
        %v622 = vmul.f32 %v577, %v603
        %v623 = vadd.f32 %v621, %v622
        %v624 = vmax.f32 %v623, 0.0
        %s625 = sld [smem:[#allocation4 + $0xf]]
        %v626 = vmul.f32 %v546, %v565
        %v627 = vstv %s625
        %v628 = vadd.f32 %v627, %v626
        %v629 = vmul.f32 %v584, %v603
        %v630 = vadd.f32 %v628, %v629
        %v631 = vmax.f32 %v630, 0.0
        %s632 = sld [smem:[#allocation4 + $0x10]]
        %v633 = vmul.f32 %v553, %v565
        %v634 = vstv %s632
        %v635 = vadd.f32 %v634, %v633
        %v636 = vmul.f32 %v591, %v603
        %v637 = vadd.f32 %v635, %v636
        %v638 = vmax.f32 %v637, 0.0
        %s639 = sld [smem:[#allocation4 + $0x11]]
        %v640 = vmul.f32 %v560, %v565
        %v641 = vstv %s639
        %v642 = vadd.f32 %v641, %v640
        %v643 = vmul.f32 %v598, %v603
        %v644 = vadd.f32 %v642, %v643
        %v645 = vmax.f32 %v644, 0.0
        %v647 = vrot.slane %v617, 7
        %v650 = vrot.slane %v624, 6
        %v653 = vrot.slane %v631, 5
        %v656 = vrot.slane %v638, 4
        %v659 = vrot.slane %v645, 3
        %v661 = vsel %vm373, %v610, %v647
        %v662 = vsel %vm375, %v661, %v650
        %v663 = vsel %vm377, %v662, %v653
        %v664 = vsel %vm379, %v663, %v656
        %v665 = vsel %vm381, %v664, %v659
        %s666 = scalar_lea.vmem %s238, 16 [#allocation7]
        %667 = vst [vmem:[%s666] sm:$0x3f] %v665
        %s668 = scalar_lea.vmem %s218, 24 [#allocation6]
        %v669 = vld [vmem:[%s668] sm:$0x3f]
        %s670 = sld [smem:[#allocation2 + $0x24]]
        %v671 = vstv %s670
        %v672 = vmul.f32 %v671, %v669
        %s673 = sld [smem:[#allocation2 + $0x25]]
        %v674 = vstv %s673
        %v675 = vmul.f32 %v674, %v669
        %v677 = vrot.slane %v675, 1
        %v679 = vadd.f32 %v672, %v677
        %s680 = sld [smem:[#allocation2 + $0x26]]
        %v681 = vstv %s680
        %v682 = vmul.f32 %v681, %v669
        %v684 = vrot.slane %v682, 2
        %v686 = vadd.f32 %v679, %v684
        %s687 = sld [smem:[#allocation2 + $0x27]]
        %v688 = vstv %s687
        %v689 = vmul.f32 %v688, %v669
        %v691 = vrot.slane %v689, 3
        %v693 = vadd.f32 %v686, %v691
        %s694 = sld [smem:[#allocation2 + $0x28]]
        %v695 = vstv %s694
        %v696 = vmul.f32 %v695, %v669
        %v698 = vrot.slane %v696, 4
        %v700 = vadd.f32 %v693, %v698
        %s701 = sld [smem:[#allocation2 + $0x29]]
        %v702 = vstv %s701
        %v703 = vmul.f32 %v702, %v669
        %v705 = vrot.slane %v703, 5
        %v707 = vadd.f32 %v700, %v705
        %s708 = sld [smem:[#allocation2 + $0x2a]]
        %v709 = vstv %s708
        %v710 = vmul.f32 %v709, %v669
        %s711 = sld [smem:[#allocation2 + $0x2b]]
        %v712 = vstv %s711
        %v713 = vmul.f32 %v712, %v669
        %v715 = vrot.slane %v713, 1
        %v717 = vadd.f32 %v710, %v715
        %s718 = sld [smem:[#allocation2 + $0x2c]]
        %v719 = vstv %s718
        %v720 = vmul.f32 %v719, %v669
        %v722 = vrot.slane %v720, 2
        %v724 = vadd.f32 %v717, %v722
        %s725 = sld [smem:[#allocation2 + $0x2d]]
        %v726 = vstv %s725
        %v727 = vmul.f32 %v726, %v669
        %v729 = vrot.slane %v727, 3
        %v731 = vadd.f32 %v724, %v729
        %s732 = sld [smem:[#allocation2 + $0x2e]]
        %v733 = vstv %s732
        %v734 = vmul.f32 %v733, %v669
        %v736 = vrot.slane %v734, 4
        %v738 = vadd.f32 %v731, %v736
        %s739 = sld [smem:[#allocation2 + $0x2f]]
        %v740 = vstv %s739
        %v741 = vmul.f32 %v740, %v669
        %v743 = vrot.slane %v741, 5
        %v745 = vadd.f32 %v738, %v743
        %s746 = sld [smem:[#allocation4 + $0x12]]
        %v747 = vmul.f32 %v671, %v707
        %v748 = vstv %s746
        %v749 = vadd.f32 %v748, %v747
        %v750 = vmul.f32 %v709, %v745
        %v751 = vadd.f32 %v749, %v750
        %v752 = vmax.f32 %v751, 0.0
        %s753 = sld [smem:[#allocation4 + $0x13]]
        %v754 = vmul.f32 %v674, %v707
        %v755 = vstv %s753
        %v756 = vadd.f32 %v755, %v754
        %v757 = vmul.f32 %v712, %v745
        %v758 = vadd.f32 %v756, %v757
        %v759 = vmax.f32 %v758, 0.0
        %s760 = sld [smem:[#allocation4 + $0x14]]
        %v761 = vmul.f32 %v681, %v707
        %v762 = vstv %s760
        %v763 = vadd.f32 %v762, %v761
        %v764 = vmul.f32 %v719, %v745
        %v765 = vadd.f32 %v763, %v764
        %v766 = vmax.f32 %v765, 0.0
        %s767 = sld [smem:[#allocation4 + $0x15]]
        %v768 = vmul.f32 %v688, %v707
        %v769 = vstv %s767
        %v770 = vadd.f32 %v769, %v768
        %v771 = vmul.f32 %v726, %v745
        %v772 = vadd.f32 %v770, %v771
        %v773 = vmax.f32 %v772, 0.0
        %s774 = sld [smem:[#allocation4 + $0x16]]
        %v775 = vmul.f32 %v695, %v707
        %v776 = vstv %s774
        %v777 = vadd.f32 %v776, %v775
        %v778 = vmul.f32 %v733, %v745
        %v779 = vadd.f32 %v777, %v778
        %v780 = vmax.f32 %v779, 0.0
        %s781 = sld [smem:[#allocation4 + $0x17]]
        %v782 = vmul.f32 %v702, %v707
        %v783 = vstv %s781
        %v784 = vadd.f32 %v783, %v782
        %v785 = vmul.f32 %v740, %v745
        %v786 = vadd.f32 %v784, %v785
        %v787 = vmax.f32 %v786, 0.0
        %v789 = vrot.slane %v759, 7
        %v792 = vrot.slane %v766, 6
        %v795 = vrot.slane %v773, 5
        %v798 = vrot.slane %v780, 4
        %v801 = vrot.slane %v787, 3
        %v803 = vsel %vm373, %v752, %v789
        %v804 = vsel %vm375, %v803, %v792
        %v805 = vsel %vm377, %v804, %v795
        %v806 = vsel %vm379, %v805, %v798
        %v807 = vsel %vm381, %v806, %v801
        %s808 = scalar_lea.vmem %s238, 24 [#allocation7]
        %809 = vst [vmem:[%s808] sm:$0x3f] %v807
        %s810 = sand.u32 %s92, 1
        %s811 = sand.u32 %s92, 1
        %s812 = smul.addr %s811, 32
        %s813 = scalar_lea.vmem [#allocation7], %s812
        // Predicated region
        $region79: #{tpu_custom_call.1} parent=65 // pred_check
          %p814 = pneg %p102
        $region80: #{tpu_custom_call.1} parent=65 // pred_check_branch
          %816 = sbr.rel (%p814) target = $region82
        $region81: #{tpu_custom_call.1} parent=65 // pred_region
          %s817 = smul.addr %s16, 8
          %s818 = scalar_lea.vmem %s3, %s817
          // Predicated region
          $region83: #{tpu_custom_call.1} parent=81 // pred_check
            _
          $region84: #{tpu_custom_call.1} parent=81 // pred_check_branch
            %820 = sbr.rel (0) target = $region86
          $region85: #{tpu_custom_call.1} parent=81 // pred_region
            // Predicated region
            $region87: #{tpu_custom_call.1} parent=85 // pred_check
              _
            $region88: #{tpu_custom_call.1} parent=85 // pred_check_branch
              %822 = sbr.rel (0) target = $region90
            $region89: #{tpu_custom_call.1} parent=85 // pred_region
              // Predicated region
              $region102: #{tpu_custom_call.1} parent=89 // pred_check
                _
              $region103: #{tpu_custom_call.1} parent=89 // pred_check_branch
                %844 = sbr.rel (0) target = $region105
              $region104: #{tpu_custom_call.1} parent=89 // pred_region
                loop: start=0, step=1, limit=1
                $region106: #{tpu_custom_call.1} parent=104 // loop_pre_header
                  _
                $region107: #{tpu_custom_call.1} parent=104 // loop_header
                  %s846 = sphi 0, %s850
                  %p847 = scmp.ge.s32.totalorder %s846, 1
                  %s851 = sphi %s813, %s813
                  %s852 = sphi %s818, %s818
                $region108: #{tpu_custom_call.1} parent=104 // loop_header_branch
                  %849 = sbr.rel (%p847) target = $region112
                $region109: #{tpu_custom_call.1} parent=104 // loop_body
                  %v853 = vld [vmem:[%s851] sm:$0xff]
                  %854 = vst [vmem:[%s852] sm:$0xff] %v853
                  %v855 = vld [vmem:[%s851 + $0x8] sm:$0xff]
                  %856 = vst [vmem:[%s852 + $0x10] sm:$0xff] %v855
                  %v857 = vld [vmem:[%s851 + $0x10] sm:$0xff]
                  %858 = vst [vmem:[%s852 + $0x20] sm:$0xff] %v857
                  %v859 = vld [vmem:[%s851 + $0x18] sm:$0xff]
                  %860 = vst [vmem:[%s852 + $0x30] sm:$0xff] %v859
                $region110: #{tpu_custom_call.1} parent=104 // loop_footer
                  %s850 = sadd.s32 1, %s846
                $region111: #{tpu_custom_call.1} parent=104 // loop_footer_branch
                  %845 = sbr.rel target = $region107
                $region112: #{tpu_custom_call.1} parent=104 // loop_exit
                  _
              $region105: #{tpu_custom_call.1} parent=89 // pred_fallthru
                _
              // Predicated region
              $region113: #{tpu_custom_call.1} parent=89 // pred_check
                _
              $region114: #{tpu_custom_call.1} parent=89 // pred_check_branch
                %862 = sbr.rel target = $region116
              $region115: #{tpu_custom_call.1} parent=89 // pred_region
                _
              $region116: #{tpu_custom_call.1} parent=89 // pred_fallthru
                _
            $region90: #{tpu_custom_call.1} parent=85 // pred_fallthru
              _
            // Predicated region
            $region91: #{tpu_custom_call.1} parent=85 // pred_check
              _
            $region92: #{tpu_custom_call.1} parent=85 // pred_check_branch
              %824 = sbr.rel target = $region94
            $region93: #{tpu_custom_call.1} parent=85 // pred_region
              %s826 = ssub.s32 256, 1
              loop: start=0, step=1, limit=1
              $region95: #{tpu_custom_call.1} parent=93 // loop_pre_header
                _
              $region96: #{tpu_custom_call.1} parent=93 // loop_header
                %s828 = sphi 0, %s832
                %p829 = scmp.ge.s32.totalorder %s828, 1
                %s833 = sphi %s813, %s813
                %s834 = sphi %s818, %s818
              $region97: #{tpu_custom_call.1} parent=93 // loop_header_branch
                %831 = sbr.rel (%p829) target = $region101
              $region98: #{tpu_custom_call.1} parent=93 // loop_body
                %v835 = vld [vmem:[%s833] sm:%s826]
                %836 = vst [vmem:[%s834] sm:%s826] %v835
                %v837 = vld [vmem:[%s833 + $0x8] sm:%s826]
                %838 = vst [vmem:[%s834 + $0x10] sm:%s826] %v837
                %v839 = vld [vmem:[%s833 + $0x10] sm:%s826]
                %840 = vst [vmem:[%s834 + $0x20] sm:%s826] %v839
                %v841 = vld [vmem:[%s833 + $0x18] sm:%s826]
                %842 = vst [vmem:[%s834 + $0x30] sm:%s826] %v841
              $region99: #{tpu_custom_call.1} parent=93 // loop_footer
                %s832 = sadd.s32 1, %s828
              $region100: #{tpu_custom_call.1} parent=93 // loop_footer_branch
                %827 = sbr.rel target = $region96
              $region101: #{tpu_custom_call.1} parent=93 // loop_exit
                _
            $region94: #{tpu_custom_call.1} parent=85 // pred_fallthru
              _
          $region86: #{tpu_custom_call.1} parent=81 // pred_fallthru
            _
          %863 = vnop
        $region82: #{tpu_custom_call.1} parent=65 // pred_fallthru
          _
      $region66: #{tpu_custom_call.1} parent=5 // pred_fallthru
        _
      %p864 = scmp.le.s32.totalorder 2, %s11
      // Predicated region
      $region117: #{tpu_custom_call.1} parent=5 // pred_check
        %p865 = pneg %p864
      $region118: #{tpu_custom_call.1} parent=5 // pred_check_branch
        %867 = sbr.rel (%p865) target = $region120
      $region119: #{tpu_custom_call.1} parent=5 // pred_region
        %s868 = ssub.s32 %s11, 2
        // Predicated region
        $region121: #{tpu_custom_call.1} parent=119 // pred_check
          %p869 = pneg %p108
        $region122: #{tpu_custom_call.1} parent=119 // pred_check_branch
          %871 = sbr.rel (%p869) target = $region124
        $region123: #{tpu_custom_call.1} parent=119 // pred_region
          %s872 = sand.u32 %s93, 1
          %s873 = sand.u32 %s93, 1
          %s874 = smul.addr %s873, 32
          %s875 = scalar_lea.vmem [#allocation7], %s874
        $region124: #{tpu_custom_call.1} parent=119 // pred_fallthru
          _
      $region120: #{tpu_custom_call.1} parent=5 // pred_fallthru
        _
    $region6: #{tpu_custom_call.1} parent=1 // loop_footer
      %s15 = sadd.s32 1, %s11
    $region7: #{tpu_custom_call.1} parent=1 // loop_footer_branch
      %10 = sbr.rel target = $region3
    $region8: #{tpu_custom_call.1} parent=1 // loop_exit
      _
    %876 = vsyncpa [#allocation3], 1
    %s877 = scalar_lea.sflag [#allocation3], 1
    %878 = vsyncpa %s877, 1
    %879 = vsyncpa [#allocation5], 1

</llo_original>
